<compile_context>
chip_gen: v7x
topology: tpu7x:2x2x1
jax: 0.10.0
libtpu: 0.0.40
codegen_flags: <defaults>
</compile_context>

<pallas_src>
import math

import jax
import jax.numpy as jnp
from jax.experimental import pallas as pl
from jax.experimental.pallas import tpu as pltpu

RMS_EPS = 1.1920928955078125e-07   # torch.finfo(float32).eps (F.rms_norm default)
MASK_VALUE = -1e30                 # finite "-inf": avoids exp(-inf - -inf) NaNs


# ----------------------------------------------------------------------------
# Per-generation tiling helpers
# ----------------------------------------------------------------------------
def _device_kind():
    try:
        return jax.devices()[0].device_kind.lower()
    except Exception:  # pragma: no cover
        return ""


def _pick_tile(dim, pref, align):
    """Largest divisor of `dim` that is <= pref and a multiple of `align`
    (halving down from pref); falls back to the full dim (always a legal block)."""
    if dim <= pref:
        return dim
    t = pref
    while t >= align:
        if dim % t == 0:
            return t
        t //= 2
    return dim


def _matmul_tiles():
    """(tm, tn, tk, vmem_limit_bytes) preferences per TPU generation."""
    kind = _device_kind()
    if "v7" in kind:   # bf16 512-tiles (double-buffered) ~6 MiB: well under 64 MiB
        return 512, 512, 512, 40 * 1024 * 1024
    if "v6" in kind:   # 2x256^2 MXU, 128 MiB VMEM
        return 512, 512, 512, 100 * 1024 * 1024
    if "v5" in kind:   # v5e: 4x128^2 MXU; keep footprint modest
        return 256, 256, 512, 64 * 1024 * 1024
    return 256, 256, 256, None


def _attn_tile(seq_len):
    kind = _device_kind()
    if "v6" in kind or "v7" in kind:
        pref = 512        # amortize ~0.35us/step overhead, fill the 256-wide MXU
    else:
        pref = 256        # v5e / unknown
    return _pick_tile(seq_len, pref, 8)


# ----------------------------------------------------------------------------
# Kernel 1: tiled  x @ w.T  (PyTorch nn.Linear weight layout, trans-B on MXU)
# Operands arrive already in bf16 (cast once in the wrapper); f32 accumulation.
# ----------------------------------------------------------------------------
def _matmul_tb_kernel(x_ref, w_ref, o_ref, acc_ref):
    @pl.when(pl.program_id(2) == 0)
    def _():
        acc_ref[...] = jnp.zeros_like(acc_ref)

    acc_ref[...] += jax.lax.dot_general(
        x_ref[...], w_ref[...], (((1,), (1,)), ((), ())),
        preferred_element_type=jnp.float32)

    @pl.when(pl.program_id(2) == pl.num_programs(2) - 1)
    def _():
        o_ref[...] = acc_ref[...].astype(o_ref.dtype)


def pallas_matmul_nt(x, w, *, out_dtype=None):
    """x: [M, K]; w: [N, K] (PyTorch Linear weight layout).  Returns x @ w.T."""
    out_dtype = out_dtype if out_dtype is not None else x.dtype
    x = x.astype(jnp.bfloat16)       # one-time casts (no-op if already bf16);
    w = w.astype(jnp.bfloat16)       # kernel tiles are fetched at half width.
    M, K = x.shape
    N, Kw = w.shape
    assert K == Kw
    tm_p, tn_p, tk_p, vmem = _matmul_tiles()
    tm = _pick_tile(M, tm_p, 8)
    tn = _pick_tile(N, tn_p, 128)
    tk = _pick_tile(K, tk_p, 128)
    return pl.pallas_call(
        _matmul_tb_kernel,
        out_shape=jax.ShapeDtypeStruct((M, N), out_dtype),
        grid=(M // tm, N // tn, K // tk),
        in_specs=[pl.BlockSpec((tm, tk), lambda i, j, k: (i, k)),
                  pl.BlockSpec((tn, tk), lambda i, j, k: (j, k))],
        out_specs=pl.BlockSpec((tm, tn), lambda i, j, k: (i, j)),
        scratch_shapes=[pltpu.VMEM((tm, tn), jnp.float32)],
        compiler_params=pltpu.CompilerParams(
            dimension_semantics=("parallel", "parallel", "arbitrary"),
            vmem_limit_bytes=vmem),
    )(x, w)


# ----------------------------------------------------------------------------
# Kernel 2: RoPE + RMSNorm (q, k) and head-major relayout of v, hoisted out of
# attention.  qkv: [B, T, 3C] bf16 -> qn, kn, vh: [B, H, T, D] bf16
# (qn pre-scaled by 1/sqrt(D)).  Grid is (T, B, H) so the cos/sin tile stays
# resident across the inner B*H iterations.
# ----------------------------------------------------------------------------
def pallas_rope_rmsnorm(qkv, cos_full, sin_full, *, n_head):
    B, T, C3 = qkv.shape
    C = C3 // 3
    H = n_head
    D = C // H
    half = D // 2
    scale = 1.0 / math.sqrt(D)
    tt = _pick_tile(T, 256, 8)

    def kernel(q_ref, k_ref, v_ref, cos_ref, sin_ref, qn_ref, kn_ref, vh_ref):
        cos = cos_ref[...]           # (tt, D); sign of 2nd half folded into sin
        sin = sin_ref[...]

        def rope(xx):                # xx: (tt, D) f32
            rolled = jnp.concatenate([xx[:, half:], xx[:, :half]], axis=-1)
            return xx * cos + rolled * sin

        def rms(xx):
            ms = jnp.mean(xx * xx, axis=-1, keepdims=True)
            return xx * jax.lax.rsqrt(ms + RMS_EPS)

        q = q_ref[0].astype(jnp.float32)     # upcast: norm math stays f32
        k = k_ref[0].astype(jnp.float32)
        qn_ref[0, 0] = (rms(rope(q)) * scale).astype(qn_ref.dtype)
        kn_ref[0, 0] = rms(rope(k)).astype(kn_ref.dtype)
        vh_ref[0, 0] = v_ref[0]              # bf16 pass-through relayout

    def in_head_spec(off):   # head h of the q (0) / k (H) / v (2H) region of qkv
        return pl.BlockSpec((1, tt, D), lambda t, b, h: (b, t, off + h))

    tab_spec = pl.BlockSpec((tt, D), lambda t, b, h: (t, 0))
    out_spec = pl.BlockSpec((1, 1, tt, D), lambda t, b, h: (b, h, t, 0))
    out_sds = jax.ShapeDtypeStruct((B, H, T, D), jnp.bfloat16)

    qn, kn, vh = pl.pallas_call(
        kernel,
        out_shape=(out_sds, out_sds, out_sds),
        grid=(T // tt, B, H),
        in_specs=[in_head_spec(0), in_head_spec(H), in_head_spec(2 * H),
                  tab_spec, tab_spec],
        out_specs=[out_spec, out_spec, out_spec],
        compiler_params=pltpu.CompilerParams(
            dimension_semantics=("parallel", "parallel", "parallel")),
    )(qkv, qkv, qkv, cos_full, sin_full)
    return qn, kn, vh


# ----------------------------------------------------------------------------
# Kernel 3: flash-style causal attention with online softmax.
#   qn, kn, vh: [B, H, T, D] bf16 (qn pre-scaled by 1/sqrt(D)); contiguous K/V DMAs.
#   returns y: [B, T, C] bf16 -- directly in the layout c_proj consumes.
# ----------------------------------------------------------------------------
def pallas_flash_attention(qn, kn, vh):
    B, H, T, D = qn.shape
    C = H * D
    tq = tkv = _attn_tile(T)
    nq, nkv = T // tq, T // tkv

    def kernel(q_ref, k_ref, v_ref, o_ref, m_ref, l_ref, acc_ref):
        qi = pl.program_id(2)
        ki = pl.program_id(3)

        @pl.when(ki == 0)
        def _():
            m_ref[...] = jnp.full_like(m_ref, -jnp.inf)
            l_ref[...] = jnp.zeros_like(l_ref)
            acc_ref[...] = jnp.zeros_like(acc_ref)

        def online_softmax_step(apply_mask):
            q = q_ref[0, 0]                               # (tq, D)  bf16
            k = k_ref[0, 0]                               # (tkv, D) bf16
            s = jax.lax.dot_general(                      # (tq, tkv) f32
                q, k, (((1,), (1,)), ((), ())),
                preferred_element_type=jnp.float32)
            if apply_mask:
                row = qi * tq + jax.lax.broadcasted_iota(jnp.int32, (tq, tkv), 0)
                col = ki * tkv + jax.lax.broadcasted_iota(jnp.int32, (tq, tkv), 1)
                s = jnp.where(col <= row, s, MASK_VALUE)
            m_prev = m_ref[...]
            m_new = jnp.maximum(m_prev, jnp.max(s, axis=-1, keepdims=True))
            alpha = jnp.exp(m_prev - m_new)
            p = jnp.exp(s - m_new)
            l_ref[...] = alpha * l_ref[...] + jnp.sum(p, axis=-1, keepdims=True)
            acc_ref[...] = alpha * acc_ref[...] + jax.lax.dot_general(
                p.astype(jnp.bfloat16), v_ref[0, 0],
                (((1,), (0,)), ((), ())), preferred_element_type=jnp.float32)
            m_ref[...] = m_new

        # tq == tkv: tiles strictly below the diagonal are fully unmasked; the
        # diagonal tile is the only one that needs the iota/compare/where mask;
        # tiles above the diagonal do no compute (and, via the clamped kv
        # index_map below, are never DMA'd either).
        @pl.when(ki < qi)
        def _():
            online_softmax_step(apply_mask=False)

        @pl.when(ki == qi)
        def _():
            online_softmax_step(apply_mask=True)

        @pl.when(ki == pl.num_programs(3) - 1)
        def _():
            inv_l = 1.0 / l_ref[...]
            o_ref[0] = (acc_ref[...] * inv_l).astype(o_ref.dtype)

    q_spec = pl.BlockSpec((1, 1, tq, D), lambda b, h, qi, ki: (b, h, qi, 0))
    # Clamp ki so causally-skipped kv steps map to the same block index as the
    # last valid step -> Pallas elides the K/V re-fetch (no wasted HBM traffic).
    kv_spec = pl.BlockSpec((1, 1, tkv, D),
                           lambda b, h, qi, ki: (b, h, jnp.minimum(ki, qi), 0))
    # TODO(synk): on v5e consider pipeline_mode=pl.Buffered(3) on the kv specs if
    # the K/V DMA remains exposed after the tile enlargement.

    return pl.pallas_call(
        kernel,
        out_shape=jax.ShapeDtypeStruct((B, T, C), jnp.bfloat16),
        grid=(B, H, nq, nkv),
        in_specs=[q_spec, kv_spec, kv_spec],
        out_specs=pl.BlockSpec((1, tq, D), lambda b, h, qi, ki: (b, qi, h)),
        scratch_shapes=[
            pltpu.VMEM((tq, 1), jnp.float32),    # running max  m
            pltpu.VMEM((tq, 1), jnp.float32),    # running sum  l
            pltpu.VMEM((tq, D), jnp.float32),    # output accumulator
        ],
        compiler_params=pltpu.CompilerParams(
            dimension_semantics=("parallel", "parallel", "parallel", "arbitrary")),
    )(qn, kn, vh)


# ----------------------------------------------------------------------------
# Full module forward
# ----------------------------------------------------------------------------
def causal_self_attention_forward(x, w_attn, w_proj, n_head):
    """x: [B, T, C]; w_attn: [3C, C]; w_proj: [C, C] (PyTorch Linear layouts)."""
    B, T, C = x.shape
    assert C % n_head == 0
    D = C // n_head
    if D % 128 != 0:
        # TODO(synk): pack 2+ heads per attention block (lane-dense) when head_dim < 128.
        raise NotImplementedError("head_dim must be a multiple of 128 for this layout")

    # c_attn: x @ W^T.  bf16 operands (cast once), bf16 qkv -> half the HBM
    # traffic for everything downstream that re-reads it.
    qkv = pallas_matmul_nt(x.reshape(B * T, C), w_attn,
                           out_dtype=jnp.bfloat16).reshape(B, T, 3 * C)

    # Rotary tables (same as the PyTorch Rotary module), full width with the
    # sign of the second half folded into sin -> single FMA pair in-kernel.
    inv_freq = 1.0 / (10000.0 ** (jnp.arange(0, D, 2, dtype=jnp.float32) / D))
    freqs = jnp.outer(jnp.arange(T, dtype=jnp.float32), inv_freq)   # [T, D//2]
    cos_h, sin_h = jnp.cos(freqs), jnp.sin(freqs)
    cos_full = jnp.concatenate([cos_h, cos_h], axis=-1)             # [T, D]
    sin_full = jnp.concatenate([sin_h, -sin_h], axis=-1)            # [T, D]

    qn, kn, vh = pallas_rope_rmsnorm(qkv, cos_full, sin_full, n_head=n_head)

    y = pallas_flash_attention(qn, kn, vh)                          # [B, T, C] bf16

    # c_proj: y @ W^T
    out = pallas_matmul_nt(y.reshape(B * T, C), w_proj, out_dtype=x.dtype)
    return out.reshape(B, T, C)


# ----------------------------------------------------------------------------
# Pure-JAX f32 reference (mirrors the PyTorch forward exactly)
# ----------------------------------------------------------------------------
def reference_forward(x, w_attn, w_proj, n_head):
    B, T, C = x.shape
    D = C // n_head
    qkv = x @ w_attn.T
    q, k, v = jnp.split(qkv, 3, axis=2)
    q = q.reshape(B, T, n_head, D)
    k = k.reshape(B, T, n_head, D)
    v = v.reshape(B, T, n_head, D)

    inv_freq = 1.0 / (10000.0 ** (jnp.arange(0, D, 2, dtype=jnp.float32) / D))
    freqs = jnp.outer(jnp.arange(T, dtype=jnp.float32), inv_freq)
    cos = jnp.cos(freqs)[None, :, None, :]
    sin = jnp.sin(freqs)[None, :, None, :]

    def rope(xx):
        x1, x2 = xx[..., : D // 2], xx[..., D // 2:]
        return jnp.concatenate([x1 * cos + x2 * sin, -x1 * sin + x2 * cos], axis=-1)

    def rms_norm(xx):
        ms = jnp.mean(xx * xx, axis=-1, keepdims=True)
        return xx * jax.lax.rsqrt(ms + RMS_EPS)

    q = rms_norm(rope(q)).transpose(0, 2, 1, 3)   # [B, H, T, D]
    k = rms_norm(rope(k)).transpose(0, 2, 1, 3)
    v = v.transpose(0, 2, 1, 3)

    s = jnp.einsum("bhqd,bhkd->bhqk", q, k) / math.sqrt(D)
    mask = jnp.tril(jnp.ones((T, T), dtype=bool))
    s = jnp.where(mask[None, None], s, -jnp.inf)
    p = jax.nn.softmax(s, axis=-1)
    y = jnp.einsum("bhqk,bhkd->bhqd", p, v)
    y = y.transpose(0, 2, 1, 3).reshape(B, T, C)
    return (y @ w_proj.T).reshape(B, T, C)


if __name__ == "__main__":
    # Small but tiling-friendly shapes: head_dim = 128 (lane-dense), several
    # q/kv tiles so the causal-skip, diagonal-mask and online-softmax paths are
    # all exercised.
    B, T, C, n_head = 2, 1024, 256, 2

    key = jax.random.PRNGKey(0)
    k_x, k_wa, k_wp = jax.random.split(key, 3)

    x = jax.random.normal(k_x, (B, T, C), dtype=jnp.float32)
    w_attn = jax.random.normal(k_wa, (3 * C, C), dtype=jnp.float32) * 0.02
    # NOTE: the PyTorch module zero-inits c_proj.weight; use small random values
    # here so the numerical check is non-trivial (forward semantics unchanged).
    w_proj = jax.random.normal(k_wp, (C, C), dtype=jnp.float32) * 0.02

    out = causal_self_attention_forward(x, w_attn, w_proj, n_head)
    out = jax.block_until_ready(out)

    ref = reference_forward(x, w_attn, w_proj, n_head)
    assert out.shape == (B, T, C)
    max_err = float(jnp.max(jnp.abs(out - ref)))
    # bf16 MXU operands + bf16 intermediates (f32 accumulation) -> loosened
    # tolerance vs the f32 reference.
    assert jnp.allclose(out, ref, rtol=3e-2, atol=3e-2), (
        f"mismatch vs JAX reference (max abs err {max_err})")

    print("KERNEL_OK")
</pallas_src>

<mosaic_0001>
module attributes {stable_mosaic.version = 11 : i64} {
  func.func @_matmul_tb_kernel(%arg0: i32, %arg1: i32, %arg2: i32, %arg3: memref<256x256xbf16, #tpu.memory_space<vmem>>, %arg4: memref<256x256xbf16, #tpu.memory_space<vmem>>, %arg5: memref<256x256xbf16, #tpu.memory_space<vmem>>, %arg6: memref<256x256xf32, #tpu.memory_space<vmem>>) attributes {dimension_semantics = [#tpu.dimension_semantics<parallel>, #tpu.dimension_semantics<parallel>, #tpu.dimension_semantics<arbitrary>], iteration_bounds = array<i64: 8, 3, 1>, scalar_prefetch = 0 : i64, scratch_operands = 1 : i64, tpu.core_type = #tpu.core_type<tc>, window_params = [{transform_indices = @transform_0, window_bounds = array<i64: 256, 256>}, {transform_indices = @transform_1, window_bounds = array<i64: 256, 256>}, {transform_indices = @transform_2, window_bounds = array<i64: 256, 256>}]} {
    %c0_i32 = arith.constant 0 : i32
    %0 = arith.cmpi eq, %arg2, %c0_i32 : i32
    %1 = arith.extui %0 : i1 to i32
    %c0_i32_0 = arith.constant 0 : i32
    %2 = arith.cmpi ne, %1, %c0_i32_0 : i32
    scf.if %2 {
      %cst_10 = arith.constant 0.000000e+00 : f32
      %12 = vector.broadcast %cst_10 : f32 to vector<256x256xf32>
      %c0_11 = arith.constant 0 : index
      %c0_12 = arith.constant 0 : index
      %13 = vector.load %arg6[%c0_11, %c0_12] : memref<256x256xf32, #tpu.memory_space<vmem>>, vector<256x256xf32>
      tpu.vector_store %arg6[%c0_11, %c0_12], %12 {strides = array<i32>} : memref<256x256xf32, #tpu.memory_space<vmem>>, vector<256x256xf32>,
    } else {
    }
    %c0 = arith.constant 0 : index
    %c0_1 = arith.constant 0 : index
    %3 = vector.load %arg6[%c0, %c0_1] : memref<256x256xf32, #tpu.memory_space<vmem>>, vector<256x256xf32>
    %c0_2 = arith.constant 0 : index
    %c0_3 = arith.constant 0 : index
    %4 = vector.load %arg3[%c0_2, %c0_3] : memref<256x256xbf16, #tpu.memory_space<vmem>>, vector<256x256xbf16>
    %c0_4 = arith.constant 0 : index
    %c0_5 = arith.constant 0 : index
    %5 = vector.load %arg4[%c0_4, %c0_5] : memref<256x256xbf16, #tpu.memory_space<vmem>>, vector<256x256xbf16>
    %cst = arith.constant dense<0.000000e+00> : vector<256x256xf32>
    %6 = tpu.matmul %4, %5, %cst {dimension_numbers = #tpu.dot_dimension_numbers<[1], [1], [0], [0], [0, 0, 1, 0], [], []>} : vector<256x256xbf16>, vector<256x256xbf16>, vector<256x256xf32> -> vector<256x256xf32>
    %7 = arith.addf %3, %6 : vector<256x256xf32>
    %c0_6 = arith.constant 0 : index
    %c0_7 = arith.constant 0 : index
    %8 = vector.load %arg6[%c0_6, %c0_7] : memref<256x256xf32, #tpu.memory_space<vmem>>, vector<256x256xf32>
    tpu.vector_store %arg6[%c0_6, %c0_7], %7 {strides = array<i32>} : memref<256x256xf32, #tpu.memory_space<vmem>>, vector<256x256xf32>,
    %c0_i32_8 = arith.constant 0 : i32
    %9 = arith.cmpi eq, %arg2, %c0_i32_8 : i32
    %10 = arith.extui %9 : i1 to i32
    %c0_i32_9 = arith.constant 0 : i32
    %11 = arith.cmpi ne, %10, %c0_i32_9 : i32
    scf.if %11 {
      %c0_10 = arith.constant 0 : index
      %c0_11 = arith.constant 0 : index
      %12 = vector.load %arg6[%c0_10, %c0_11] : memref<256x256xf32, #tpu.memory_space<vmem>>, vector<256x256xf32>
      %13 = arith.truncf %12 : vector<256x256xf32> to vector<256x256xbf16>
      %c0_12 = arith.constant 0 : index
      %c0_13 = arith.constant 0 : index
      %14 = vector.load %arg5[%c0_12, %c0_13] : memref<256x256xbf16, #tpu.memory_space<vmem>>, vector<256x256xbf16>
      tpu.vector_store %arg5[%c0_12, %c0_13], %13 {strides = array<i32>} : memref<256x256xbf16, #tpu.memory_space<vmem>>, vector<256x256xbf16>,
    } else {
    }
    return
  }
  func.func @transform_0(%arg0: i32, %arg1: i32, %arg2: i32) -> (i32, i32) {
    %c0_i32 = arith.constant 0 : i32
    return %arg0, %arg2 : i32, i32
  }
  func.func @transform_1(%arg0: i32, %arg1: i32, %arg2: i32) -> (i32, i32) {
    %c0_i32 = arith.constant 0 : i32
    return %arg1, %arg2 : i32, i32
  }
  func.func @transform_2(%arg0: i32, %arg1: i32, %arg2: i32) -> (i32, i32) {
    %c0_i32 = arith.constant 0 : i32
    return %arg0, %arg1 : i32, i32
  }
}

</mosaic_0001>

<llo_original>
// kernel: tpu_custom_call.1
$region0: #{tpu_custom_call.1}
  #allocation0 [shape = 'u32[]', space=smem, size = 0x4, offset = 0x4, fixed_abs, tag = 'smem constant byte address 0x4 - core index']
  #allocation1 [shape = 'u32[144,128]{1,0:T(1,128)}', space=vmem, size = 0x12000, scoped, tag = 'internal scratch']
  #allocation2 [shape = 'f32[256,256]{1,0:T(8,128)}', space=vmem, size = 0x40000, scoped, tag = 'scratch operand']
  %s0 = inlined_call_operand.hbm [shape: bf16[2048,256], index: 0, kind: input, shape index: {}]
  %s1 = inlined_call_operand.hbm [shape: bf16[768,256], index: 1, kind: input, shape index: {}]
  %s2 = inlined_call_operand.hbm [shape: bf16[2048,768], index: 2, kind: output, shape index: {}]
  %s3 = sld [smem:[#allocation0]]
  $region57: #{tpu_custom_call.1} parent=0
    _
  %s5 = ssub.s32 1, %s3
  %s6 = scalar_select 0, %s5, %s3
  $region1: #{tpu_custom_call.1} parent=0
    #allocation3 [shape = 'u8[262144]{0}', space=vmem, size = 0x40000, scoped, tag = 'input window, operand 0']
    #allocation4 [shape = 's32[2]{0}', space=sflag, size = 0x8, scoped, tag = 'scoped memory for tpu_custom_call.1']
    #allocation5 [shape = 's32[2]{0}', space=sflag, size = 0x8, scoped, tag = 'scoped memory for tpu_custom_call.1']
    #allocation6 [shape = 'u8[262144]{0}', space=vmem, size = 0x40000, scoped, tag = 'input window, operand 1']
    #allocation7 [shape = 's32[2]{0}', space=sflag, size = 0x8, scoped, tag = 'scoped memory for tpu_custom_call.1']
    #allocation8 [shape = 'u8[262144]{0}', space=vmem, size = 0x40000, scoped, tag = 'output window, operand 0']
    %7 = vsyncpa [#allocation4], 0
    %s8 = scalar_lea.sflag [#allocation4], 1
    %9 = vsyncpa %s8, 0
    %10 = vsyncpa [#allocation7], 0
    %s11 = scalar_lea.sflag [#allocation7], 1
    %12 = vsyncpa %s11, 0
    %13 = vsyncpa [#allocation5], 0
    %s14 = scalar_lea.sflag [#allocation5], 1
    %15 = vsyncpa %s14, 0
    loop: start=0, step=1, limit=26
    $region2: #{tpu_custom_call.1} parent=1 // loop_pre_header
      _
    $region3: #{tpu_custom_call.1} parent=1 // loop_header
      %s17 = sphi 0, %s21
      %p18 = scmp.ge.s32.totalorder %s17, 26
      %s24 = sphi 0, %s43
      %s25 = sphi 0, %s39
      %s26 = sphi 0, %s35
      %s27 = sphi 0, %s24
      %s28 = sphi 0, %s25
      %s29 = sphi 0, %s26
      %s30 = sphi 0, %s27
      %s31 = sphi 0, %s28
      %s32 = sphi 0, %s29
      %s48 = sphi 0, %s50
      %s51 = sphi 0, %s48
      %s52 = sphi 0, %s51
      %s68 = sphi 0, %s52
      %s76 = sphi 0, %s78
      %s79 = sphi 0, %s76
      %s80 = sphi 0, %s79
      %s96 = sphi 0, %s80
      %s104 = sphi 0, %s106
      %s107 = sphi 0, %s104
      %s108 = sphi 0, %s107
      %s124 = sphi 0, %s108
    $region4: #{tpu_custom_call.1} parent=1 // loop_header_branch
      %20 = sbr.rel (%p18) target = $region8
    $region5: #{tpu_custom_call.1} parent=1 // loop_body
      %s22 = ssub.s32 %s17, 1
      %s23 = ssub.s32 %s17, 2
      %s33 = sadd.s32 1, %s26
      %p34 = scmp.ge.s32.totalorder %s33, 1
      %s35 = scalar_select %p34, 0, %s33
      %s36 = sadd.s32 1, %s25
      %s37 = scalar_select %p34, %s36, %s25
      %p38 = scmp.ge.s32.totalorder %s37, 3
      %s39 = scalar_select %p38, 0, %s37
      %s40 = sadd.s32 1, %s24
      %s41 = scalar_select %p38, %s40, %s24
      %p42 = scmp.ge.s32.totalorder %s41, 8
      %s43 = scalar_select %p42, 0, %s41
      %s44 = ssub.s32 %s24, %s43
      %s45 = ssub.s32 %s26, %s35
      %s46 = sor.u32 %s44, %s45
      %p47 = scmp.eq.s32.totalorder %s46, 0
      %s49 = sadd.s32 %s48, 1
      %s50 = scalar_select %p47, %s48, %s49
      %p53 = pneg %p47
      %p54 = scmp.eq.s32.totalorder %s17, 23
      %p55 = por %p53, %p54
      %p56 = scmp.ne.s32.totalorder %s48, %s51
      %p57 = scmp.eq.s32.totalorder %s17, 0
      %p58 = por %p56, %p57
      %p59 = scmp.ne.s32.totalorder %s48, %s51
      %p60 = scmp.eq.s32.totalorder %s22, 23
      %p61 = por %p59, %p60
      %p62 = scmp.ne.s32.totalorder %s51, %s52
      %p63 = scmp.eq.s32.totalorder %s22, 0
      %p64 = por %p62, %p63
      %p65 = scmp.ne.s32.totalorder %s51, %s52
      %p66 = scmp.eq.s32.totalorder %s23, 23
      %p67 = por %p65, %p66
      %p69 = scmp.ne.s32.totalorder %s52, %s68
      %p70 = scmp.eq.s32.totalorder %s23, 0
      %p71 = por %p69, %p70
      %s72 = ssub.s32 %s25, %s39
      %s73 = ssub.s32 %s26, %s35
      %s74 = sor.u32 %s72, %s73
      %p75 = scmp.eq.s32.totalorder %s74, 0
      %s77 = sadd.s32 %s76, 1
      %s78 = scalar_select %p75, %s76, %s77
      %p81 = pneg %p75
      %p82 = scmp.eq.s32.totalorder %s17, 23
      %p83 = por %p81, %p82
      %p84 = scmp.ne.s32.totalorder %s76, %s79
      %p85 = scmp.eq.s32.totalorder %s17, 0
      %p86 = por %p84, %p85
      %p87 = scmp.ne.s32.totalorder %s76, %s79
      %p88 = scmp.eq.s32.totalorder %s22, 23
      %p89 = por %p87, %p88
      %p90 = scmp.ne.s32.totalorder %s79, %s80
      %p91 = scmp.eq.s32.totalorder %s22, 0
      %p92 = por %p90, %p91
      %p93 = scmp.ne.s32.totalorder %s79, %s80
      %p94 = scmp.eq.s32.totalorder %s23, 23
      %p95 = por %p93, %p94
      %p97 = scmp.ne.s32.totalorder %s80, %s96
      %p98 = scmp.eq.s32.totalorder %s23, 0
      %p99 = por %p97, %p98
      %s100 = ssub.s32 %s24, %s43
      %s101 = ssub.s32 %s25, %s39
      %s102 = sor.u32 %s100, %s101
      %p103 = scmp.eq.s32.totalorder %s102, 0
      %s105 = sadd.s32 %s104, 1
      %s106 = scalar_select %p103, %s104, %s105
      %p109 = pneg %p103
      %p110 = scmp.eq.s32.totalorder %s17, 23
      %p111 = por %p109, %p110
      %p112 = scmp.ne.s32.totalorder %s104, %s107
      %p113 = scmp.eq.s32.totalorder %s17, 0
      %p114 = por %p112, %p113
      %p115 = scmp.ne.s32.totalorder %s104, %s107
      %p116 = scmp.eq.s32.totalorder %s22, 23
      %p117 = por %p115, %p116
      %p118 = scmp.ne.s32.totalorder %s107, %s108
      %p119 = scmp.eq.s32.totalorder %s22, 0
      %p120 = por %p118, %p119
      %p121 = scmp.ne.s32.totalorder %s107, %s108
      %p122 = scmp.eq.s32.totalorder %s23, 23
      %p123 = por %p121, %p122
      %p125 = scmp.ne.s32.totalorder %s108, %s124
      %p126 = scmp.eq.s32.totalorder %s23, 0
      %p127 = por %p125, %p126
      %p128 = scmp.le.s32.totalorder 1, %s17
      %p129 = scmp.lt.s32.totalorder %s17, 25
      %p130 = pnand %p128, %p129
      %p131 = pneg %p130
      // Predicated region
      $region9: #{tpu_custom_call.1} parent=5 // pred_check
        _
      $region10: #{tpu_custom_call.1} parent=5 // pred_check_branch
        %133 = sbr.rel (%p130) target = $region12
      $region11: #{tpu_custom_call.1} parent=5 // pred_region
        %s134 = ssub.s32 %s17, 1
      $region12: #{tpu_custom_call.1} parent=5 // pred_fallthru
        _
      %p135 = scmp.lt.s32.totalorder %s17, 24
      // Predicated region
      $region13: #{tpu_custom_call.1} parent=5 // pred_check
        %p136 = pneg %p135
      $region14: #{tpu_custom_call.1} parent=5 // pred_check_branch
        %138 = sbr.rel (%p136) target = $region16
      $region15: #{tpu_custom_call.1} parent=5 // pred_region
        // Predicated region
        $region17: #{tpu_custom_call.1} parent=15 // pred_check
          %p139 = pneg %p58
        $region18: #{tpu_custom_call.1} parent=15 // pred_check_branch
          %141 = sbr.rel (%p139) target = $region20
        $region19: #{tpu_custom_call.1} parent=15 // pred_region
          %s142 = sand.u32 %s48, 1
          %s143 = scalar_lea.sflag [#allocation4], %s142
          %s144 = sand.u32 %s48, 1
          %s145 = smul.addr %s144, 256
          %s146 = scalar_lea.vmem [#allocation3], %s145
          %s147 = smul.u32 32, %s24
          %s148 = smul.u32 2, %s26
          %s150 = ssub.s32 4096, 4096
          %151 = vsyncadd %s143, %s150
          %s152 = smul.addr %s147, 2
          %s153 = sadd.s32 %s148, %s152
          %s154 = smul.addr %s153, 64
          %s155 = scalar_lea.hbm %s0, %s154
          %s156 = sshll.u32 %s146, 4
          %s157 = int_to_ptr.vmem [resolvable:$true] %s156
          %162 = dma.hbm_to_vmem [thread:$0]  %s155, 4096, %s157, %s143, 128, 128, 8
        $region20: #{tpu_custom_call.1} parent=15 // pred_fallthru
          _
        // Predicated region
        $region21: #{tpu_custom_call.1} parent=15 // pred_check
          %p163 = pneg %p86
        $region22: #{tpu_custom_call.1} parent=15 // pred_check_branch
          %165 = sbr.rel (%p163) target = $region24
        $region23: #{tpu_custom_call.1} parent=15 // pred_region
          %s166 = sand.u32 %s76, 1
          %s167 = scalar_lea.sflag [#allocation7], %s166
          %s168 = sand.u32 %s76, 1
          %s169 = smul.addr %s168, 256
          %s170 = scalar_lea.vmem [#allocation6], %s169
          %s171 = smul.u32 32, %s25
          %s172 = smul.u32 2, %s26
          %s174 = ssub.s32 4096, 4096
          %175 = vsyncadd %s167, %s174
          %s176 = smul.addr %s171, 2
          %s177 = sadd.s32 %s172, %s176
          %s178 = smul.addr %s177, 64
          %s179 = scalar_lea.hbm %s1, %s178
          %s180 = sshll.u32 %s170, 4
          %s181 = int_to_ptr.vmem [resolvable:$true] %s180
          %186 = dma.hbm_to_vmem [thread:$0]  %s179, 4096, %s181, %s167, 128, 128, 8
        $region24: #{tpu_custom_call.1} parent=15 // pred_fallthru
          _
      $region16: #{tpu_custom_call.1} parent=5 // pred_fallthru
        _
      %p187 = scmp.le.s32.totalorder 1, %s17
      %p188 = scmp.lt.s32.totalorder %s17, 25
      %p189 = pnand %p187, %p188
      %p190 = pneg %p189
      // Predicated region
      $region25: #{tpu_custom_call.1} parent=5 // pred_check
        _
      $region26: #{tpu_custom_call.1} parent=5 // pred_check_branch
        %192 = sbr.rel (%p189) target = $region28
      $region27: #{tpu_custom_call.1} parent=5 // pred_region
        %s193 = ssub.s32 %s17, 1
        %s194 = sand.u32 %s51, 1
        %s195 = scalar_lea.sflag [#allocation4], %s194
        %s196 = sand.u32 %s51, 1
        %s197 = smul.addr %s196, 256
        %s198 = scalar_lea.vmem [#allocation3], %s197
        // Predicated region
        $region29: #{tpu_custom_call.1} parent=27 // pred_check
          %p199 = pneg %p64
        $region30: #{tpu_custom_call.1} parent=27 // pred_check_branch
          %201 = sbr.rel (%p199) target = $region32
        $region31: #{tpu_custom_call.1} parent=27 // pred_region
          %202 = dma.done %s195, 4096
        $region32: #{tpu_custom_call.1} parent=27 // pred_fallthru
          _
        %s203 = sand.u32 %s79, 1
        %s204 = scalar_lea.sflag [#allocation7], %s203
        %s205 = sand.u32 %s79, 1
        %s206 = smul.addr %s205, 256
        %s207 = scalar_lea.vmem [#allocation6], %s206
        // Predicated region
        $region33: #{tpu_custom_call.1} parent=27 // pred_check
          %p208 = pneg %p92
        $region34: #{tpu_custom_call.1} parent=27 // pred_check_branch
          %210 = sbr.rel (%p208) target = $region36
        $region35: #{tpu_custom_call.1} parent=27 // pred_region
          %211 = dma.done %s204, 4096
        $region36: #{tpu_custom_call.1} parent=27 // pred_fallthru
          _
        %s212 = sand.u32 %s51, 1
        %s213 = scalar_lea.sflag [#allocation4], %s212
        %s214 = sand.u32 %s51, 1
        %s215 = smul.addr %s214, 256
        %s216 = scalar_lea.vmem [#allocation3], %s215
        %p217 = pneg %p64
        %p218 = pneg %p61
        %s219 = sand.u32 %s79, 1
        %s220 = scalar_lea.sflag [#allocation7], %s219
        %s221 = sand.u32 %s79, 1
        %s222 = smul.addr %s221, 256
        %s223 = scalar_lea.vmem [#allocation6], %s222
        %p224 = pneg %p92
        %p225 = pneg %p89
        %p226 = pneg %p120
        %p227 = pneg %p117
        %s228 = sand.u32 %s107, 1
        %s229 = scalar_lea.sflag [#allocation5], %s228
        %s230 = sand.u32 %s107, 1
        %s231 = smul.addr %s230, 256
        %s232 = scalar_lea.vmem [#allocation8], %s231
        %s233 = smul.u32 32, %s27
        %s234 = smul.u32 2, %s29
        %s235 = smul.u32 32, %s28
        %s236 = smul.u32 2, %s29
        %s237 = smul.u32 32, %s27
        %s238 = smul.u32 2, %s28
        %p239 = scmp.eq.s32.totalorder %s29, 0
        // Predicated region
        $region37: #{tpu_custom_call.1} parent=27 // pred_check
          %p240 = pneg %p239
        $region38: #{tpu_custom_call.1} parent=27 // pred_check_branch
          %242 = sbr.rel (%p240) target = $region40
        $region39: #{tpu_custom_call.1} parent=27 // pred_region
          %243 = vst [vmem:[#allocation2] sm:$0xff] 0.0
          %244 = vst [vmem:[#allocation2 + $0x8] sm:$0xff] 0.0
          %245 = vst [vmem:[#allocation2 + $0x10] sm:$0xff] 0.0
          %246 = vst [vmem:[#allocation2 + $0x18] sm:$0xff] 0.0
          %247 = vst [vmem:[#allocation2 + $0x20] sm:$0xff] 0.0
          %248 = vst [vmem:[#allocation2 + $0x28] sm:$0xff] 0.0
          %249 = vst [vmem:[#allocation2 + $0x30] sm:$0xff] 0.0
          %250 = vst [vmem:[#allocation2 + $0x38] sm:$0xff] 0.0
          %251 = vst [vmem:[#allocation2 + $0x40] sm:$0xff] 0.0
          %252 = vst [vmem:[#allocation2 + $0x48] sm:$0xff] 0.0
          %253 = vst [vmem:[#allocation2 + $0x50] sm:$0xff] 0.0
          %254 = vst [vmem:[#allocation2 + $0x58] sm:$0xff] 0.0
          %255 = vst [vmem:[#allocation2 + $0x60] sm:$0xff] 0.0
          %256 = vst [vmem:[#allocation2 + $0x68] sm:$0xff] 0.0
          %257 = vst [vmem:[#allocation2 + $0x70] sm:$0xff] 0.0
          %258 = vst [vmem:[#allocation2 + $0x78] sm:$0xff] 0.0
          %259 = vst [vmem:[#allocation2 + $0x80] sm:$0xff] 0.0
          %260 = vst [vmem:[#allocation2 + $0x88] sm:$0xff] 0.0
          %261 = vst [vmem:[#allocation2 + $0x90] sm:$0xff] 0.0
          %262 = vst [vmem:[#allocation2 + $0x98] sm:$0xff] 0.0
          %263 = vst [vmem:[#allocation2 + $0xa0] sm:$0xff] 0.0
          %264 = vst [vmem:[#allocation2 + $0xa8] sm:$0xff] 0.0
          %265 = vst [vmem:[#allocation2 + $0xb0] sm:$0xff] 0.0
          %266 = vst [vmem:[#allocation2 + $0xb8] sm:$0xff] 0.0
          %267 = vst [vmem:[#allocation2 + $0xc0] sm:$0xff] 0.0
          %268 = vst [vmem:[#allocation2 + $0xc8] sm:$0xff] 0.0
          %269 = vst [vmem:[#allocation2 + $0xd0] sm:$0xff] 0.0
          %270 = vst [vmem:[#allocation2 + $0xd8] sm:$0xff] 0.0
          %271 = vst [vmem:[#allocation2 + $0xe0] sm:$0xff] 0.0
          %272 = vst [vmem:[#allocation2 + $0xe8] sm:$0xff] 0.0
          %273 = vst [vmem:[#allocation2 + $0xf0] sm:$0xff] 0.0
          %274 = vst [vmem:[#allocation2 + $0xf8] sm:$0xff] 0.0
          %275 = vst [vmem:[#allocation2 + $0x100] sm:$0xff] 0.0
          %276 = vst [vmem:[#allocation2 + $0x108] sm:$0xff] 0.0
          %277 = vst [vmem:[#allocation2 + $0x110] sm:$0xff] 0.0
          %278 = vst [vmem:[#allocation2 + $0x118] sm:$0xff] 0.0
          %279 = vst [vmem:[#allocation2 + $0x120] sm:$0xff] 0.0
          %280 = vst [vmem:[#allocation2 + $0x128] sm:$0xff] 0.0
          %281 = vst [vmem:[#allocation2 + $0x130] sm:$0xff] 0.0
          %282 = vst [vmem:[#allocation2 + $0x138] sm:$0xff] 0.0
          %283 = vst [vmem:[#allocation2 + $0x140] sm:$0xff] 0.0
          %284 = vst [vmem:[#allocation2 + $0x148] sm:$0xff] 0.0
          %285 = vst [vmem:[#allocation2 + $0x150] sm:$0xff] 0.0
          %286 = vst [vmem:[#allocation2 + $0x158] sm:$0xff] 0.0
          %287 = vst [vmem:[#allocation2 + $0x160] sm:$0xff] 0.0
          %288 = vst [vmem:[#allocation2 + $0x168] sm:$0xff] 0.0
          %289 = vst [vmem:[#allocation2 + $0x170] sm:$0xff] 0.0
          %290 = vst [vmem:[#allocation2 + $0x178] sm:$0xff] 0.0
          %291 = vst [vmem:[#allocation2 + $0x180] sm:$0xff] 0.0
          %292 = vst [vmem:[#allocation2 + $0x188] sm:$0xff] 0.0
          %293 = vst [vmem:[#allocation2 + $0x190] sm:$0xff] 0.0
          %294 = vst [vmem:[#allocation2 + $0x198] sm:$0xff] 0.0
          %295 = vst [vmem:[#allocation2 + $0x1a0] sm:$0xff] 0.0
          %296 = vst [vmem:[#allocation2 + $0x1a8] sm:$0xff] 0.0
          %297 = vst [vmem:[#allocation2 + $0x1b0] sm:$0xff] 0.0
          %298 = vst [vmem:[#allocation2 + $0x1b8] sm:$0xff] 0.0
          %299 = vst [vmem:[#allocation2 + $0x1c0] sm:$0xff] 0.0
          %300 = vst [vmem:[#allocation2 + $0x1c8] sm:$0xff] 0.0
          %301 = vst [vmem:[#allocation2 + $0x1d0] sm:$0xff] 0.0
          %302 = vst [vmem:[#allocation2 + $0x1d8] sm:$0xff] 0.0
          %303 = vst [vmem:[#allocation2 + $0x1e0] sm:$0xff] 0.0
          %304 = vst [vmem:[#allocation2 + $0x1e8] sm:$0xff] 0.0
          %305 = vst [vmem:[#allocation2 + $0x1f0] sm:$0xff] 0.0
          %306 = vst [vmem:[#allocation2 + $0x1f8] sm:$0xff] 0.0
        $region40: #{tpu_custom_call.1} parent=27 // pred_fallthru
          _
        %v307 = vld [vmem:[#allocation2] sm:$0xff]
        %v308 = vld [vmem:[#allocation2 + $0x8] sm:$0xff]
        %v309 = vld [vmem:[#allocation2 + $0x10] sm:$0xff]
        %v310 = vld [vmem:[#allocation2 + $0x18] sm:$0xff]
        %v311 = vld [vmem:[#allocation2 + $0x20] sm:$0xff]
        %v312 = vld [vmem:[#allocation2 + $0x28] sm:$0xff]
        %v313 = vld [vmem:[#allocation2 + $0x30] sm:$0xff]
        %v314 = vld [vmem:[#allocation2 + $0x38] sm:$0xff]
        %v315 = vld [vmem:[#allocation2 + $0x40] sm:$0xff]
        %v316 = vld [vmem:[#allocation2 + $0x48] sm:$0xff]
        %v317 = vld [vmem:[#allocation2 + $0x50] sm:$0xff]
        %v318 = vld [vmem:[#allocation2 + $0x58] sm:$0xff]
        %v319 = vld [vmem:[#allocation2 + $0x60] sm:$0xff]
        %v320 = vld [vmem:[#allocation2 + $0x68] sm:$0xff]
        %v321 = vld [vmem:[#allocation2 + $0x70] sm:$0xff]
        %v322 = vld [vmem:[#allocation2 + $0x78] sm:$0xff]
        %v323 = vld [vmem:[#allocation2 + $0x80] sm:$0xff]
        %v324 = vld [vmem:[#allocation2 + $0x88] sm:$0xff]
        %v325 = vld [vmem:[#allocation2 + $0x90] sm:$0xff]
        %v326 = vld [vmem:[#allocation2 + $0x98] sm:$0xff]
        %v327 = vld [vmem:[#allocation2 + $0xa0] sm:$0xff]
        %v328 = vld [vmem:[#allocation2 + $0xa8] sm:$0xff]
        %v329 = vld [vmem:[#allocation2 + $0xb0] sm:$0xff]
        %v330 = vld [vmem:[#allocation2 + $0xb8] sm:$0xff]
        %v331 = vld [vmem:[#allocation2 + $0xc0] sm:$0xff]
        %v332 = vld [vmem:[#allocation2 + $0xc8] sm:$0xff]
        %v333 = vld [vmem:[#allocation2 + $0xd0] sm:$0xff]
        %v334 = vld [vmem:[#allocation2 + $0xd8] sm:$0xff]
        %v335 = vld [vmem:[#allocation2 + $0xe0] sm:$0xff]
        %v336 = vld [vmem:[#allocation2 + $0xe8] sm:$0xff]
        %v337 = vld [vmem:[#allocation2 + $0xf0] sm:$0xff]
        %v338 = vld [vmem:[#allocation2 + $0xf8] sm:$0xff]
        %v339 = vld [vmem:[#allocation2 + $0x100] sm:$0xff]
        %v340 = vld [vmem:[#allocation2 + $0x108] sm:$0xff]
        %v341 = vld [vmem:[#allocation2 + $0x110] sm:$0xff]
        %v342 = vld [vmem:[#allocation2 + $0x118] sm:$0xff]
        %v343 = vld [vmem:[#allocation2 + $0x120] sm:$0xff]
        %v344 = vld [vmem:[#allocation2 + $0x128] sm:$0xff]
        %v345 = vld [vmem:[#allocation2 + $0x130] sm:$0xff]
        %v346 = vld [vmem:[#allocation2 + $0x138] sm:$0xff]
        %v347 = vld [vmem:[#allocation2 + $0x140] sm:$0xff]
        %v348 = vld [vmem:[#allocation2 + $0x148] sm:$0xff]
        %v349 = vld [vmem:[#allocation2 + $0x150] sm:$0xff]
        %v350 = vld [vmem:[#allocation2 + $0x158] sm:$0xff]
        %v351 = vld [vmem:[#allocation2 + $0x160] sm:$0xff]
        %v352 = vld [vmem:[#allocation2 + $0x168] sm:$0xff]
        %v353 = vld [vmem:[#allocation2 + $0x170] sm:$0xff]
        %v354 = vld [vmem:[#allocation2 + $0x178] sm:$0xff]
        %v355 = vld [vmem:[#allocation2 + $0x180] sm:$0xff]
        %v356 = vld [vmem:[#allocation2 + $0x188] sm:$0xff]
        %v357 = vld [vmem:[#allocation2 + $0x190] sm:$0xff]
        %v358 = vld [vmem:[#allocation2 + $0x198] sm:$0xff]
        %v359 = vld [vmem:[#allocation2 + $0x1a0] sm:$0xff]
        %v360 = vld [vmem:[#allocation2 + $0x1a8] sm:$0xff]
        %v361 = vld [vmem:[#allocation2 + $0x1b0] sm:$0xff]
        %v362 = vld [vmem:[#allocation2 + $0x1b8] sm:$0xff]
        %v363 = vld [vmem:[#allocation2 + $0x1c0] sm:$0xff]
        %v364 = vld [vmem:[#allocation2 + $0x1c8] sm:$0xff]
        %v365 = vld [vmem:[#allocation2 + $0x1d0] sm:$0xff]
        %v366 = vld [vmem:[#allocation2 + $0x1d8] sm:$0xff]
        %v367 = vld [vmem:[#allocation2 + $0x1e0] sm:$0xff]
        %v368 = vld [vmem:[#allocation2 + $0x1e8] sm:$0xff]
        %v369 = vld [vmem:[#allocation2 + $0x1f0] sm:$0xff]
        %v370 = vld [vmem:[#allocation2 + $0x1f8] sm:$0xff]
        %v371 = vld [vmem:[%s198] sm:$0xff]
        %v372 = vld [vmem:[%s198 + $0x8] sm:$0xff]
        %v373 = vld [vmem:[%s198 + $0x10] sm:$0xff]
        %v374 = vld [vmem:[%s198 + $0x18] sm:$0xff]
        %v375 = vld [vmem:[%s198 + $0x20] sm:$0xff]
        %v376 = vld [vmem:[%s198 + $0x28] sm:$0xff]
        %v377 = vld [vmem:[%s198 + $0x30] sm:$0xff]
        %v378 = vld [vmem:[%s198 + $0x38] sm:$0xff]
        %v379 = vld [vmem:[%s198 + $0x40] sm:$0xff]
        %v380 = vld [vmem:[%s198 + $0x48] sm:$0xff]
        %v381 = vld [vmem:[%s198 + $0x50] sm:$0xff]
        %v382 = vld [vmem:[%s198 + $0x58] sm:$0xff]
        %v383 = vld [vmem:[%s198 + $0x60] sm:$0xff]
        %v384 = vld [vmem:[%s198 + $0x68] sm:$0xff]
        %v385 = vld [vmem:[%s198 + $0x70] sm:$0xff]
        %v386 = vld [vmem:[%s198 + $0x78] sm:$0xff]
        %v387 = vld [vmem:[%s198 + $0x80] sm:$0xff]
        %v388 = vld [vmem:[%s198 + $0x88] sm:$0xff]
        %v389 = vld [vmem:[%s198 + $0x90] sm:$0xff]
        %v390 = vld [vmem:[%s198 + $0x98] sm:$0xff]
        %v391 = vld [vmem:[%s198 + $0xa0] sm:$0xff]
        %v392 = vld [vmem:[%s198 + $0xa8] sm:$0xff]
        %v393 = vld [vmem:[%s198 + $0xb0] sm:$0xff]
        %v394 = vld [vmem:[%s198 + $0xb8] sm:$0xff]
        %v395 = vld [vmem:[%s198 + $0xc0] sm:$0xff]
        %v396 = vld [vmem:[%s198 + $0xc8] sm:$0xff]
        %v397 = vld [vmem:[%s198 + $0xd0] sm:$0xff]
        %v398 = vld [vmem:[%s198 + $0xd8] sm:$0xff]
        %v399 = vld [vmem:[%s198 + $0xe0] sm:$0xff]
        %v400 = vld [vmem:[%s198 + $0xe8] sm:$0xff]
        %v401 = vld [vmem:[%s198 + $0xf0] sm:$0xff]
        %v402 = vld [vmem:[%s198 + $0xf8] sm:$0xff]
        %v403 = vld [vmem:[%s207] sm:$0xff]
        %v404 = vld [vmem:[%s207 + $0x8] sm:$0xff]
        %v405 = vld [vmem:[%s207 + $0x10] sm:$0xff]
        %v406 = vld [vmem:[%s207 + $0x18] sm:$0xff]
        %v407 = vld [vmem:[%s207 + $0x20] sm:$0xff]
        %v408 = vld [vmem:[%s207 + $0x28] sm:$0xff]
        %v409 = vld [vmem:[%s207 + $0x30] sm:$0xff]
        %v410 = vld [vmem:[%s207 + $0x38] sm:$0xff]
        %v411 = vld [vmem:[%s207 + $0x40] sm:$0xff]
        %v412 = vld [vmem:[%s207 + $0x48] sm:$0xff]
        %v413 = vld [vmem:[%s207 + $0x50] sm:$0xff]
        %v414 = vld [vmem:[%s207 + $0x58] sm:$0xff]
        %v415 = vld [vmem:[%s207 + $0x60] sm:$0xff]
        %v416 = vld [vmem:[%s207 + $0x68] sm:$0xff]
        %v417 = vld [vmem:[%s207 + $0x70] sm:$0xff]
        %v418 = vld [vmem:[%s207 + $0x78] sm:$0xff]
        %v419 = vld [vmem:[%s207 + $0x80] sm:$0xff]
        %v420 = vld [vmem:[%s207 + $0x88] sm:$0xff]
        %v421 = vld [vmem:[%s207 + $0x90] sm:$0xff]
        %v422 = vld [vmem:[%s207 + $0x98] sm:$0xff]
        %v423 = vld [vmem:[%s207 + $0xa0] sm:$0xff]
        %v424 = vld [vmem:[%s207 + $0xa8] sm:$0xff]
        %v425 = vld [vmem:[%s207 + $0xb0] sm:$0xff]
        %v426 = vld [vmem:[%s207 + $0xb8] sm:$0xff]
        %v427 = vld [vmem:[%s207 + $0xc0] sm:$0xff]
        %v428 = vld [vmem:[%s207 + $0xc8] sm:$0xff]
        %v429 = vld [vmem:[%s207 + $0xd0] sm:$0xff]
        %v430 = vld [vmem:[%s207 + $0xd8] sm:$0xff]
        %v431 = vld [vmem:[%s207 + $0xe0] sm:$0xff]
        %v432 = vld [vmem:[%s207 + $0xe8] sm:$0xff]
        %v433 = vld [vmem:[%s207 + $0xf0] sm:$0xff]
        %v434 = vld [vmem:[%s207 + $0xf8] sm:$0xff]
        %v467 = vunpack.c.l.b16 %v371
        %v468 = vunpack.c.h.b16 %v371
        %v469 = vunpack.c.l.b16 %v372
        %v470 = vunpack.c.h.b16 %v372
        %v471 = vunpack.c.l.b16 %v373
        %v472 = vunpack.c.h.b16 %v373
        %v473 = vunpack.c.l.b16 %v374
        %v474 = vunpack.c.h.b16 %v374
        %v475 = vunpack.c.l.b16 %v375
        %v476 = vunpack.c.h.b16 %v375
        %v477 = vunpack.c.l.b16 %v376
        %v478 = vunpack.c.h.b16 %v376
        %v479 = vunpack.c.l.b16 %v377
        %v480 = vunpack.c.h.b16 %v377
        %v481 = vunpack.c.l.b16 %v378
        %v482 = vunpack.c.h.b16 %v378
        %v483 = vunpack.c.l.b16 %v379
        %v484 = vunpack.c.h.b16 %v379
        %v485 = vunpack.c.l.b16 %v380
        %v486 = vunpack.c.h.b16 %v380
        %v487 = vunpack.c.l.b16 %v381
        %v488 = vunpack.c.h.b16 %v381
        %v489 = vunpack.c.l.b16 %v382
        %v490 = vunpack.c.h.b16 %v382
        %v491 = vunpack.c.l.b16 %v383
        %v492 = vunpack.c.h.b16 %v383
        %v493 = vunpack.c.l.b16 %v384
        %v494 = vunpack.c.h.b16 %v384
        %v495 = vunpack.c.l.b16 %v385
        %v496 = vunpack.c.h.b16 %v385
        %v497 = vunpack.c.l.b16 %v386
        %v498 = vunpack.c.h.b16 %v386
        %v499 = vunpack.c.l.b16 %v387
        %v500 = vunpack.c.h.b16 %v387
        %v501 = vunpack.c.l.b16 %v388
        %v502 = vunpack.c.h.b16 %v388
        %v503 = vunpack.c.l.b16 %v389
        %v504 = vunpack.c.h.b16 %v389
        %v505 = vunpack.c.l.b16 %v390
        %v506 = vunpack.c.h.b16 %v390
        %v507 = vunpack.c.l.b16 %v391
        %v508 = vunpack.c.h.b16 %v391
        %v509 = vunpack.c.l.b16 %v392
        %v510 = vunpack.c.h.b16 %v392
        %v511 = vunpack.c.l.b16 %v393
        %v512 = vunpack.c.h.b16 %v393
        %v513 = vunpack.c.l.b16 %v394
        %v514 = vunpack.c.h.b16 %v394
        %v515 = vunpack.c.l.b16 %v395
        %v516 = vunpack.c.h.b16 %v395
        %v517 = vunpack.c.l.b16 %v396
        %v518 = vunpack.c.h.b16 %v396
        %v519 = vunpack.c.l.b16 %v397
        %v520 = vunpack.c.h.b16 %v397
        %v521 = vunpack.c.l.b16 %v398
        %v522 = vunpack.c.h.b16 %v398
        %v523 = vunpack.c.l.b16 %v399
        %v524 = vunpack.c.h.b16 %v399
        %v525 = vunpack.c.l.b16 %v400
        %v526 = vunpack.c.h.b16 %v400
        %v527 = vunpack.c.l.b16 %v401
        %v528 = vunpack.c.h.b16 %v401
        %v529 = vunpack.c.l.b16 %v402
        %v530 = vunpack.c.h.b16 %v402
        %v531 = vpack.c.b16 %v469, %v467
        %v532 = vpack.c.b16 %v470, %v468
        %v533 = vpack.c.b16 %v473, %v471
        %v534 = vpack.c.b16 %v474, %v472
        %v535 = vpack.c.b16 %v477, %v475
        %v536 = vpack.c.b16 %v478, %v476
        %v537 = vpack.c.b16 %v481, %v479
        %v538 = vpack.c.b16 %v482, %v480
        %v539 = vpack.c.b16 %v485, %v483
        %v540 = vpack.c.b16 %v486, %v484
        %v541 = vpack.c.b16 %v489, %v487
        %v542 = vpack.c.b16 %v490, %v488
        %v543 = vpack.c.b16 %v493, %v491
        %v544 = vpack.c.b16 %v494, %v492
        %v545 = vpack.c.b16 %v497, %v495
        %v546 = vpack.c.b16 %v498, %v496
        %v547 = vpack.c.b16 %v501, %v499
        %v548 = vpack.c.b16 %v502, %v500
        %v549 = vpack.c.b16 %v505, %v503
        %v550 = vpack.c.b16 %v506, %v504
        %v551 = vpack.c.b16 %v509, %v507
        %v552 = vpack.c.b16 %v510, %v508
        %v553 = vpack.c.b16 %v513, %v511
        %v554 = vpack.c.b16 %v514, %v512
        %v555 = vpack.c.b16 %v517, %v515
        %v556 = vpack.c.b16 %v518, %v516
        %v557 = vpack.c.b16 %v521, %v519
        %v558 = vpack.c.b16 %v522, %v520
        %v559 = vpack.c.b16 %v525, %v523
        %v560 = vpack.c.b16 %v526, %v524
        %v561 = vpack.c.b16 %v529, %v527
        %v562 = vpack.c.b16 %v530, %v528
        %v627 = vunpack.c.l.b16 %v403
        %v628 = vunpack.c.h.b16 %v403
        %v629 = vunpack.c.l.b16 %v404
        %v630 = vunpack.c.h.b16 %v404
        %v631 = vunpack.c.l.b16 %v405
        %v632 = vunpack.c.h.b16 %v405
        %v633 = vunpack.c.l.b16 %v406
        %v634 = vunpack.c.h.b16 %v406
        %v635 = vunpack.c.l.b16 %v407
        %v636 = vunpack.c.h.b16 %v407
        %v637 = vunpack.c.l.b16 %v408
        %v638 = vunpack.c.h.b16 %v408
        %v639 = vunpack.c.l.b16 %v409
        %v640 = vunpack.c.h.b16 %v409
        %v641 = vunpack.c.l.b16 %v410
        %v642 = vunpack.c.h.b16 %v410
        %v643 = vunpack.c.l.b16 %v411
        %v644 = vunpack.c.h.b16 %v411
        %v645 = vunpack.c.l.b16 %v412
        %v646 = vunpack.c.h.b16 %v412
        %v647 = vunpack.c.l.b16 %v413
        %v648 = vunpack.c.h.b16 %v413
        %v649 = vunpack.c.l.b16 %v414
        %v650 = vunpack.c.h.b16 %v414
        %v651 = vunpack.c.l.b16 %v415
        %v652 = vunpack.c.h.b16 %v415
        %v653 = vunpack.c.l.b16 %v416
        %v654 = vunpack.c.h.b16 %v416
        %v655 = vunpack.c.l.b16 %v417
        %v656 = vunpack.c.h.b16 %v417
        %v657 = vunpack.c.l.b16 %v418
        %v658 = vunpack.c.h.b16 %v418
        %v659 = vunpack.c.l.b16 %v419
        %v660 = vunpack.c.h.b16 %v419
        %v661 = vunpack.c.l.b16 %v420
        %v662 = vunpack.c.h.b16 %v420
        %v663 = vunpack.c.l.b16 %v421
        %v664 = vunpack.c.h.b16 %v421
        %v665 = vunpack.c.l.b16 %v422
        %v666 = vunpack.c.h.b16 %v422
        %v667 = vunpack.c.l.b16 %v423
        %v668 = vunpack.c.h.b16 %v423
        %v669 = vunpack.c.l.b16 %v424
        %v670 = vunpack.c.h.b16 %v424
        %v671 = vunpack.c.l.b16 %v425
        %v672 = vunpack.c.h.b16 %v425
        %v673 = vunpack.c.l.b16 %v426
        %v674 = vunpack.c.h.b16 %v426
        %v675 = vunpack.c.l.b16 %v427
        %v676 = vunpack.c.h.b16 %v427
        %v677 = vunpack.c.l.b16 %v428
        %v678 = vunpack.c.h.b16 %v428
        %v679 = vunpack.c.l.b16 %v429
        %v680 = vunpack.c.h.b16 %v429
        %v681 = vunpack.c.l.b16 %v430
        %v682 = vunpack.c.h.b16 %v430
        %v683 = vunpack.c.l.b16 %v431
        %v684 = vunpack.c.h.b16 %v431
        %v685 = vunpack.c.l.b16 %v432
        %v686 = vunpack.c.h.b16 %v432
        %v687 = vunpack.c.l.b16 %v433
        %v688 = vunpack.c.h.b16 %v433
        %v689 = vunpack.c.l.b16 %v434
        %v690 = vunpack.c.h.b16 %v434
        %v691 = vpack.c.b16 %v629, %v627
        %v692 = vpack.c.b16 %v630, %v628
        %v693 = vpack.c.b16 %v633, %v631
        %v694 = vpack.c.b16 %v634, %v632
        %v695 = vpack.c.b16 %v637, %v635
        %v696 = vpack.c.b16 %v638, %v636
        %v697 = vpack.c.b16 %v641, %v639
        %v698 = vpack.c.b16 %v642, %v640
        %v699 = vpack.c.b16 %v645, %v643
        %v700 = vpack.c.b16 %v646, %v644
        %v701 = vpack.c.b16 %v649, %v647
        %v702 = vpack.c.b16 %v650, %v648
        %v703 = vpack.c.b16 %v653, %v651
        %v704 = vpack.c.b16 %v654, %v652
        %v705 = vpack.c.b16 %v657, %v655
        %v706 = vpack.c.b16 %v658, %v656
        %v707 = vpack.c.b16 %v661, %v659
        %v708 = vpack.c.b16 %v662, %v660
        %v709 = vpack.c.b16 %v665, %v663
        %v710 = vpack.c.b16 %v666, %v664
        %v711 = vpack.c.b16 %v669, %v667
        %v712 = vpack.c.b16 %v670, %v668
        %v713 = vpack.c.b16 %v673, %v671
        %v714 = vpack.c.b16 %v674, %v672
        %v715 = vpack.c.b16 %v677, %v675
        %v716 = vpack.c.b16 %v678, %v676
        %v717 = vpack.c.b16 %v681, %v679
        %v718 = vpack.c.b16 %v682, %v680
        %v719 = vpack.c.b16 %v685, %v683
        %v720 = vpack.c.b16 %v686, %v684
        %v721 = vpack.c.b16 %v689, %v687
        %v722 = vpack.c.b16 %v690, %v688
        %755 = vmatprep.subr.bf16.mxu0 %v692
        %756 = vmatpush1.bf16.xpose.msra.mxu0 %v691
        %757 = vmatprep.subr.bf16.mxu0 %v694
        %758 = vmatpush1.bf16.xpose.msra.mxu0 %v693
        %759 = vmatprep.subr.bf16.mxu0 %v696
        %760 = vmatpush1.bf16.xpose.msra.mxu0 %v695
        %761 = vmatprep.subr.bf16.mxu0 %v698
        %762 = vmatpush1.bf16.xpose.msra.mxu0 %v697
        %763 = vmatprep.subr.bf16.mxu0 %v700
        %764 = vmatpush1.bf16.xpose.msra.mxu0 %v699
        %765 = vmatprep.subr.bf16.mxu0 %v702
        %766 = vmatpush1.bf16.xpose.msra.mxu0 %v701
        %767 = vmatprep.subr.bf16.mxu0 %v704
        %768 = vmatpush1.bf16.xpose.msra.mxu0 %v703
        %769 = vmatprep.subr.bf16.mxu0 %v706
        %770 = vmatpush1.bf16.xpose.msra.mxu0 %v705
        %771 = vmatprep.subr.bf16.mxu0 %v708
        %772 = vmatpush1.bf16.xpose.msra.mxu0 %v707
        %773 = vmatprep.subr.bf16.mxu0 %v710
        %774 = vmatpush1.bf16.xpose.msra.mxu0 %v709
        %775 = vmatprep.subr.bf16.mxu0 %v712
        %776 = vmatpush1.bf16.xpose.msra.mxu0 %v711
        %777 = vmatprep.subr.bf16.mxu0 %v714
        %778 = vmatpush1.bf16.xpose.msra.mxu0 %v713
        %779 = vmatprep.subr.bf16.mxu0 %v716
        %780 = vmatpush1.bf16.xpose.msra.mxu0 %v715
        %781 = vmatprep.subr.bf16.mxu0 %v718
        %782 = vmatpush1.bf16.xpose.msra.mxu0 %v717
        %783 = vmatprep.subr.bf16.mxu0 %v720
        %784 = vmatpush1.bf16.xpose.msra.mxu0 %v719
        %785 = vmatprep.subr.bf16.mxu0 %v722
        %786 = vmatpush1.bf16.xpose.msra.mxu0 %v721
        %787 = vmatprep.mubr.bf16.mxu0 %v532
        %788 = vmatmul.mubr.bf16.gmra.mrb[0].mxu0 %v531
        %v789 = vpop.f32.mrb[0].mxu0
        %v790 = vadd.f32 0.0, %v789
        %v791 = vpop.f32.mrb[0].mxu0
        %v792 = vadd.f32 0.0, %v791
        %v793 = vpop.f32.mrb[0].mxu0
        %v794 = vadd.f32 0.0, %v793
        %v795 = vpop.f32.mrb[0].mxu0
        %v796 = vadd.f32 0.0, %v795
        %797 = vmatprep.mubr.bf16.mxu0 %v534
        %798 = vmatmul.mubr.bf16.gmra.mrb[0].mxu0 %v533
        %v799 = vpop.f32.mrb[0].mxu0
        %v800 = vadd.f32 0.0, %v799
        %v801 = vpop.f32.mrb[0].mxu0
        %v802 = vadd.f32 0.0, %v801
        %v803 = vpop.f32.mrb[0].mxu0
        %v804 = vadd.f32 0.0, %v803
        %v805 = vpop.f32.mrb[0].mxu0
        %v806 = vadd.f32 0.0, %v805
        %807 = vmatprep.mubr.bf16.mxu0 %v536
        %808 = vmatmul.mubr.bf16.gmra.mrb[0].mxu0 %v535
        %v809 = vpop.f32.mrb[0].mxu0
        %v810 = vadd.f32 0.0, %v809
        %v811 = vpop.f32.mrb[0].mxu0
        %v812 = vadd.f32 0.0, %v811
        %v813 = vpop.f32.mrb[0].mxu0
        %v814 = vadd.f32 0.0, %v813
        %v815 = vpop.f32.mrb[0].mxu0
        %v816 = vadd.f32 0.0, %v815
        %817 = vmatprep.mubr.bf16.mxu0 %v538
        %818 = vmatmul.mubr.bf16.gmra.mrb[0].mxu0 %v537
        %v819 = vpop.f32.mrb[0].mxu0
        %v820 = vadd.f32 0.0, %v819
        %v821 = vpop.f32.mrb[0].mxu0
        %v822 = vadd.f32 0.0, %v821
        %v823 = vpop.f32.mrb[0].mxu0
        %v824 = vadd.f32 0.0, %v823
        %v825 = vpop.f32.mrb[0].mxu0
        %v826 = vadd.f32 0.0, %v825
        %827 = vmatprep.mubr.bf16.mxu0 %v540
        %828 = vmatmul.mubr.bf16.gmra.mrb[0].mxu0 %v539
        %v829 = vpop.f32.mrb[0].mxu0
        %v830 = vadd.f32 0.0, %v829
        %v831 = vpop.f32.mrb[0].mxu0
        %v832 = vadd.f32 0.0, %v831
        %v833 = vpop.f32.mrb[0].mxu0
        %v834 = vadd.f32 0.0, %v833
        %v835 = vpop.f32.mrb[0].mxu0
        %v836 = vadd.f32 0.0, %v835
        %837 = vmatprep.mubr.bf16.mxu0 %v542
        %838 = vmatmul.mubr.bf16.gmra.mrb[0].mxu0 %v541
        %v839 = vpop.f32.mrb[0].mxu0
        %v840 = vadd.f32 0.0, %v839
        %v841 = vpop.f32.mrb[0].mxu0
        %v842 = vadd.f32 0.0, %v841
        %v843 = vpop.f32.mrb[0].mxu0
        %v844 = vadd.f32 0.0, %v843
        %v845 = vpop.f32.mrb[0].mxu0
        %v846 = vadd.f32 0.0, %v845
        %847 = vmatprep.mubr.bf16.mxu0 %v544
        %848 = vmatmul.mubr.bf16.gmra.mrb[0].mxu0 %v543
        %v849 = vpop.f32.mrb[0].mxu0
        %v850 = vadd.f32 0.0, %v849
        %v851 = vpop.f32.mrb[0].mxu0
        %v852 = vadd.f32 0.0, %v851
        %v853 = vpop.f32.mrb[0].mxu0
        %v854 = vadd.f32 0.0, %v853
        %v855 = vpop.f32.mrb[0].mxu0
        %v856 = vadd.f32 0.0, %v855
        %857 = vmatprep.mubr.bf16.mxu0 %v546
        %858 = vmatmul.mubr.bf16.gmra.mrb[0].mxu0 %v545
        %v859 = vpop.f32.mrb[0].mxu0
        %v860 = vadd.f32 0.0, %v859
        %v861 = vpop.f32.mrb[0].mxu0
        %v862 = vadd.f32 0.0, %v861
        %v863 = vpop.f32.mrb[0].mxu0
        %v864 = vadd.f32 0.0, %v863
        %v865 = vpop.f32.mrb[0].mxu0
        %v866 = vadd.f32 0.0, %v865
        %867 = vmatprep.mubr.bf16.mxu0 %v548
        %868 = vmatmul.mubr.bf16.gmra.mrb[0].mxu0 %v547
        %v869 = vpop.f32.mrb[0].mxu0
        %v870 = vadd.f32 0.0, %v869
        %v871 = vpop.f32.mrb[0].mxu0
        %v872 = vadd.f32 0.0, %v871
        %v873 = vpop.f32.mrb[0].mxu0
        %v874 = vadd.f32 0.0, %v873
        %v875 = vpop.f32.mrb[0].mxu0
        %v876 = vadd.f32 0.0, %v875
        %877 = vmatprep.mubr.bf16.mxu0 %v550
        %878 = vmatmul.mubr.bf16.gmra.mrb[0].mxu0 %v549
        %v879 = vpop.f32.mrb[0].mxu0
        %v880 = vadd.f32 0.0, %v879
        %v881 = vpop.f32.mrb[0].mxu0
        %v882 = vadd.f32 0.0, %v881
        %v883 = vpop.f32.mrb[0].mxu0
        %v884 = vadd.f32 0.0, %v883
        %v885 = vpop.f32.mrb[0].mxu0
        %v886 = vadd.f32 0.0, %v885
        %887 = vmatprep.mubr.bf16.mxu0 %v552
        %888 = vmatmul.mubr.bf16.gmra.mrb[0].mxu0 %v551
        %v889 = vpop.f32.mrb[0].mxu0
        %v890 = vadd.f32 0.0, %v889
        %v891 = vpop.f32.mrb[0].mxu0
        %v892 = vadd.f32 0.0, %v891
        %v893 = vpop.f32.mrb[0].mxu0
        %v894 = vadd.f32 0.0, %v893
        %v895 = vpop.f32.mrb[0].mxu0
        %v896 = vadd.f32 0.0, %v895
        %897 = vmatprep.mubr.bf16.mxu0 %v554
        %898 = vmatmul.mubr.bf16.gmra.mrb[0].mxu0 %v553
        %v899 = vpop.f32.mrb[0].mxu0
        %v900 = vadd.f32 0.0, %v899
        %v901 = vpop.f32.mrb[0].mxu0
        %v902 = vadd.f32 0.0, %v901
        %v903 = vpop.f32.mrb[0].mxu0
        %v904 = vadd.f32 0.0, %v903
        %v905 = vpop.f32.mrb[0].mxu0
        %v906 = vadd.f32 0.0, %v905
        %907 = vmatprep.mubr.bf16.mxu0 %v556
        %908 = vmatmul.mubr.bf16.gmra.mrb[0].mxu0 %v555
        %v909 = vpop.f32.mrb[0].mxu0
        %v910 = vadd.f32 0.0, %v909
        %v911 = vpop.f32.mrb[0].mxu0
        %v912 = vadd.f32 0.0, %v911
        %v913 = vpop.f32.mrb[0].mxu0
        %v914 = vadd.f32 0.0, %v913
        %v915 = vpop.f32.mrb[0].mxu0
        %v916 = vadd.f32 0.0, %v915
        %917 = vmatprep.mubr.bf16.mxu0 %v558
        %918 = vmatmul.mubr.bf16.gmra.mrb[0].mxu0 %v557
        %v919 = vpop.f32.mrb[0].mxu0
        %v920 = vadd.f32 0.0, %v919
        %v921 = vpop.f32.mrb[0].mxu0
        %v922 = vadd.f32 0.0, %v921
        %v923 = vpop.f32.mrb[0].mxu0
        %v924 = vadd.f32 0.0, %v923
        %v925 = vpop.f32.mrb[0].mxu0
        %v926 = vadd.f32 0.0, %v925
        %927 = vmatprep.mubr.bf16.mxu0 %v560
        %928 = vmatmul.mubr.bf16.gmra.mrb[0].mxu0 %v559
        %v929 = vpop.f32.mrb[0].mxu0
        %v930 = vadd.f32 0.0, %v929
        %v931 = vpop.f32.mrb[0].mxu0
        %v932 = vadd.f32 0.0, %v931
        %v933 = vpop.f32.mrb[0].mxu0
        %v934 = vadd.f32 0.0, %v933
        %v935 = vpop.f32.mrb[0].mxu0
        %v936 = vadd.f32 0.0, %v935
        %937 = vmatprep.mubr.bf16.mxu0 %v562
        %938 = vmatmul.mubr.bf16.gmra.mrb[0].mxu0 %v561
        %v939 = vpop.f32.mrb[0].mxu0
        %v940 = vadd.f32 0.0, %v939
        %v941 = vpop.f32.mrb[0].mxu0
        %v942 = vadd.f32 0.0, %v941
        %v943 = vpop.f32.mrb[0].mxu0
        %v944 = vadd.f32 0.0, %v943
        %v945 = vpop.f32.mrb[0].mxu0
        %v946 = vadd.f32 0.0, %v945
        %947 = vdwg.mxu0
        %v948 = vadd.f32 %v307, %v790
        %v949 = vadd.f32 %v308, %v792
        %v950 = vadd.f32 %v309, %v794
        %v951 = vadd.f32 %v310, %v796
        %v952 = vadd.f32 %v311, %v800
        %v953 = vadd.f32 %v312, %v802
        %v954 = vadd.f32 %v313, %v804
        %v955 = vadd.f32 %v314, %v806
        %v956 = vadd.f32 %v315, %v810
        %v957 = vadd.f32 %v316, %v812
        %v958 = vadd.f32 %v317, %v814
        %v959 = vadd.f32 %v318, %v816
        %v960 = vadd.f32 %v319, %v820
        %v961 = vadd.f32 %v320, %v822
        %v962 = vadd.f32 %v321, %v824
        %v963 = vadd.f32 %v322, %v826
        %v964 = vadd.f32 %v323, %v830
        %v965 = vadd.f32 %v324, %v832
        %v966 = vadd.f32 %v325, %v834
        %v967 = vadd.f32 %v326, %v836
        %v968 = vadd.f32 %v327, %v840
        %v969 = vadd.f32 %v328, %v842
        %v970 = vadd.f32 %v329, %v844
        %v971 = vadd.f32 %v330, %v846
        %v972 = vadd.f32 %v331, %v850
        %v973 = vadd.f32 %v332, %v852
        %v974 = vadd.f32 %v333, %v854
        %v975 = vadd.f32 %v334, %v856
        %v976 = vadd.f32 %v335, %v860
        %v977 = vadd.f32 %v336, %v862
        %v978 = vadd.f32 %v337, %v864
        %v979 = vadd.f32 %v338, %v866
        %v980 = vadd.f32 %v339, %v870
        %v981 = vadd.f32 %v340, %v872
        %v982 = vadd.f32 %v341, %v874
        %v983 = vadd.f32 %v342, %v876
        %v984 = vadd.f32 %v343, %v880
        %v985 = vadd.f32 %v344, %v882
        %v986 = vadd.f32 %v345, %v884
        %v987 = vadd.f32 %v346, %v886
        %v988 = vadd.f32 %v347, %v890
        %v989 = vadd.f32 %v348, %v892
        %v990 = vadd.f32 %v349, %v894
        %v991 = vadd.f32 %v350, %v896
        %v992 = vadd.f32 %v351, %v900
        %v993 = vadd.f32 %v352, %v902
        %v994 = vadd.f32 %v353, %v904
        %v995 = vadd.f32 %v354, %v906
        %v996 = vadd.f32 %v355, %v910
        %v997 = vadd.f32 %v356, %v912
        %v998 = vadd.f32 %v357, %v914
        %v999 = vadd.f32 %v358, %v916
        %v1000 = vadd.f32 %v359, %v920
        %v1001 = vadd.f32 %v360, %v922
        %v1002 = vadd.f32 %v361, %v924
        %v1003 = vadd.f32 %v362, %v926
        %v1004 = vadd.f32 %v363, %v930
        %v1005 = vadd.f32 %v364, %v932
        %v1006 = vadd.f32 %v365, %v934
        %v1007 = vadd.f32 %v366, %v936
        %v1008 = vadd.f32 %v367, %v940
        %v1009 = vadd.f32 %v368, %v942
        %v1010 = vadd.f32 %v369, %v944
        %v1011 = vadd.f32 %v370, %v946
        %1012 = vst [vmem:[#allocation2] sm:$0xff] %v948
        %1013 = vst [vmem:[#allocation2 + $0x8] sm:$0xff] %v949
        %1014 = vst [vmem:[#allocation2 + $0x10] sm:$0xff] %v950
        %1015 = vst [vmem:[#allocation2 + $0x18] sm:$0xff] %v951
        %1016 = vst [vmem:[#allocation2 + $0x20] sm:$0xff] %v952
        %1017 = vst [vmem:[#allocation2 + $0x28] sm:$0xff] %v953
        %1018 = vst [vmem:[#allocation2 + $0x30] sm:$0xff] %v954
        %1019 = vst [vmem:[#allocation2 + $0x38] sm:$0xff] %v955
        %1020 = vst [vmem:[#allocation2 + $0x40] sm:$0xff] %v956
        %1021 = vst [vmem:[#allocation2 + $0x48] sm:$0xff] %v957
        %1022 = vst [vmem:[#allocation2 + $0x50] sm:$0xff] %v958
        %1023 = vst [vmem:[#allocation2 + $0x58] sm:$0xff] %v959
        %1024 = vst [vmem:[#allocation2 + $0x60] sm:$0xff] %v960
        %1025 = vst [vmem:[#allocation2 + $0x68] sm:$0xff] %v961
        %1026 = vst [vmem:[#allocation2 + $0x70] sm:$0xff] %v962
        %1027 = vst [vmem:[#allocation2 + $0x78] sm:$0xff] %v963
        %1028 = vst [vmem:[#allocation2 + $0x80] sm:$0xff] %v964
        %1029 = vst [vmem:[#allocation2 + $0x88] sm:$0xff] %v965
        %1030 = vst [vmem:[#allocation2 + $0x90] sm:$0xff] %v966
        %1031 = vst [vmem:[#allocation2 + $0x98] sm:$0xff] %v967
        %1032 = vst [vmem:[#allocation2 + $0xa0] sm:$0xff] %v968
        %1033 = vst [vmem:[#allocation2 + $0xa8] sm:$0xff] %v969
        %1034 = vst [vmem:[#allocation2 + $0xb0] sm:$0xff] %v970
        %1035 = vst [vmem:[#allocation2 + $0xb8] sm:$0xff] %v971
        %1036 = vst [vmem:[#allocation2 + $0xc0] sm:$0xff] %v972
        %1037 = vst [vmem:[#allocation2 + $0xc8] sm:$0xff] %v973
        %1038 = vst [vmem:[#allocation2 + $0xd0] sm:$0xff] %v974
        %1039 = vst [vmem:[#allocation2 + $0xd8] sm:$0xff] %v975
        %1040 = vst [vmem:[#allocation2 + $0xe0] sm:$0xff] %v976
        %1041 = vst [vmem:[#allocation2 + $0xe8] sm:$0xff] %v977
        %1042 = vst [vmem:[#allocation2 + $0xf0] sm:$0xff] %v978
        %1043 = vst [vmem:[#allocation2 + $0xf8] sm:$0xff] %v979
        %1044 = vst [vmem:[#allocation2 + $0x100] sm:$0xff] %v980
        %1045 = vst [vmem:[#allocation2 + $0x108] sm:$0xff] %v981
        %1046 = vst [vmem:[#allocation2 + $0x110] sm:$0xff] %v982
        %1047 = vst [vmem:[#allocation2 + $0x118] sm:$0xff] %v983
        %1048 = vst [vmem:[#allocation2 + $0x120] sm:$0xff] %v984
        %1049 = vst [vmem:[#allocation2 + $0x128] sm:$0xff] %v985
        %1050 = vst [vmem:[#allocation2 + $0x130] sm:$0xff] %v986
        %1051 = vst [vmem:[#allocation2 + $0x138] sm:$0xff] %v987
        %1052 = vst [vmem:[#allocation2 + $0x140] sm:$0xff] %v988
        %1053 = vst [vmem:[#allocation2 + $0x148] sm:$0xff] %v989
        %1054 = vst [vmem:[#allocation2 + $0x150] sm:$0xff] %v990
        %1055 = vst [vmem:[#allocation2 + $0x158] sm:$0xff] %v991
        %1056 = vst [vmem:[#allocation2 + $0x160] sm:$0xff] %v992
        %1057 = vst [vmem:[#allocation2 + $0x168] sm:$0xff] %v993
        %1058 = vst [vmem:[#allocation2 + $0x170] sm:$0xff] %v994
        %1059 = vst [vmem:[#allocation2 + $0x178] sm:$0xff] %v995
        %1060 = vst [vmem:[#allocation2 + $0x180] sm:$0xff] %v996
        %1061 = vst [vmem:[#allocation2 + $0x188] sm:$0xff] %v997
        %1062 = vst [vmem:[#allocation2 + $0x190] sm:$0xff] %v998
        %1063 = vst [vmem:[#allocation2 + $0x198] sm:$0xff] %v999
        %1064 = vst [vmem:[#allocation2 + $0x1a0] sm:$0xff] %v1000
        %1065 = vst [vmem:[#allocation2 + $0x1a8] sm:$0xff] %v1001
        %1066 = vst [vmem:[#allocation2 + $0x1b0] sm:$0xff] %v1002
        %1067 = vst [vmem:[#allocation2 + $0x1b8] sm:$0xff] %v1003
        %1068 = vst [vmem:[#allocation2 + $0x1c0] sm:$0xff] %v1004
        %1069 = vst [vmem:[#allocation2 + $0x1c8] sm:$0xff] %v1005
        %1070 = vst [vmem:[#allocation2 + $0x1d0] sm:$0xff] %v1006
        %1071 = vst [vmem:[#allocation2 + $0x1d8] sm:$0xff] %v1007
        %1072 = vst [vmem:[#allocation2 + $0x1e0] sm:$0xff] %v1008
        %1073 = vst [vmem:[#allocation2 + $0x1e8] sm:$0xff] %v1009
        %1074 = vst [vmem:[#allocation2 + $0x1f0] sm:$0xff] %v1010
        %1075 = vst [vmem:[#allocation2 + $0x1f8] sm:$0xff] %v1011
        // Predicated region
        $region41: #{tpu_custom_call.1} parent=27 // pred_check
          %p1076 = pneg %p239
        $region42: #{tpu_custom_call.1} parent=27 // pred_check_branch
          %1078 = sbr.rel (%p1076) target = $region44
        $region43: #{tpu_custom_call.1} parent=27 // pred_region
          %v1079 = vld [vmem:[#allocation2] sm:$0xff]
          %v1080 = vld [vmem:[#allocation2 + $0x8] sm:$0xff]
          %v1081 = vld [vmem:[#allocation2 + $0x10] sm:$0xff]
          %v1082 = vld [vmem:[#allocation2 + $0x18] sm:$0xff]
          %v1083 = vld [vmem:[#allocation2 + $0x20] sm:$0xff]
          %v1084 = vld [vmem:[#allocation2 + $0x28] sm:$0xff]
          %v1085 = vld [vmem:[#allocation2 + $0x30] sm:$0xff]
          %v1086 = vld [vmem:[#allocation2 + $0x38] sm:$0xff]
          %v1087 = vld [vmem:[#allocation2 + $0x40] sm:$0xff]
          %v1088 = vld [vmem:[#allocation2 + $0x48] sm:$0xff]
          %v1089 = vld [vmem:[#allocation2 + $0x50] sm:$0xff]
          %v1090 = vld [vmem:[#allocation2 + $0x58] sm:$0xff]
          %v1091 = vld [vmem:[#allocation2 + $0x60] sm:$0xff]
          %v1092 = vld [vmem:[#allocation2 + $0x68] sm:$0xff]
          %v1093 = vld [vmem:[#allocation2 + $0x70] sm:$0xff]
          %v1094 = vld [vmem:[#allocation2 + $0x78] sm:$0xff]
          %v1095 = vld [vmem:[#allocation2 + $0x80] sm:$0xff]
          %v1096 = vld [vmem:[#allocation2 + $0x88] sm:$0xff]
          %v1097 = vld [vmem:[#allocation2 + $0x90] sm:$0xff]
          %v1098 = vld [vmem:[#allocation2 + $0x98] sm:$0xff]
          %v1099 = vld [vmem:[#allocation2 + $0xa0] sm:$0xff]
          %v1100 = vld [vmem:[#allocation2 + $0xa8] sm:$0xff]
          %v1101 = vld [vmem:[#allocation2 + $0xb0] sm:$0xff]
          %v1102 = vld [vmem:[#allocation2 + $0xb8] sm:$0xff]
          %v1103 = vld [vmem:[#allocation2 + $0xc0] sm:$0xff]
          %v1104 = vld [vmem:[#allocation2 + $0xc8] sm:$0xff]
          %v1105 = vld [vmem:[#allocation2 + $0xd0] sm:$0xff]
          %v1106 = vld [vmem:[#allocation2 + $0xd8] sm:$0xff]
          %v1107 = vld [vmem:[#allocation2 + $0xe0] sm:$0xff]
          %v1108 = vld [vmem:[#allocation2 + $0xe8] sm:$0xff]
          %v1109 = vld [vmem:[#allocation2 + $0xf0] sm:$0xff]
          %v1110 = vld [vmem:[#allocation2 + $0xf8] sm:$0xff]
          %v1111 = vld [vmem:[#allocation2 + $0x100] sm:$0xff]
          %v1112 = vld [vmem:[#allocation2 + $0x108] sm:$0xff]
          %v1113 = vld [vmem:[#allocation2 + $0x110] sm:$0xff]
          %v1114 = vld [vmem:[#allocation2 + $0x118] sm:$0xff]
          %v1115 = vld [vmem:[#allocation2 + $0x120] sm:$0xff]
          %v1116 = vld [vmem:[#allocation2 + $0x128] sm:$0xff]
          %v1117 = vld [vmem:[#allocation2 + $0x130] sm:$0xff]
          %v1118 = vld [vmem:[#allocation2 + $0x138] sm:$0xff]
          %v1119 = vld [vmem:[#allocation2 + $0x140] sm:$0xff]
          %v1120 = vld [vmem:[#allocation2 + $0x148] sm:$0xff]
          %v1121 = vld [vmem:[#allocation2 + $0x150] sm:$0xff]
          %v1122 = vld [vmem:[#allocation2 + $0x158] sm:$0xff]
          %v1123 = vld [vmem:[#allocation2 + $0x160] sm:$0xff]
          %v1124 = vld [vmem:[#allocation2 + $0x168] sm:$0xff]
          %v1125 = vld [vmem:[#allocation2 + $0x170] sm:$0xff]
          %v1126 = vld [vmem:[#allocation2 + $0x178] sm:$0xff]
          %v1127 = vld [vmem:[#allocation2 + $0x180] sm:$0xff]
          %v1128 = vld [vmem:[#allocation2 + $0x188] sm:$0xff]
          %v1129 = vld [vmem:[#allocation2 + $0x190] sm:$0xff]
          %v1130 = vld [vmem:[#allocation2 + $0x198] sm:$0xff]
          %v1131 = vld [vmem:[#allocation2 + $0x1a0] sm:$0xff]
          %v1132 = vld [vmem:[#allocation2 + $0x1a8] sm:$0xff]
          %v1133 = vld [vmem:[#allocation2 + $0x1b0] sm:$0xff]
          %v1134 = vld [vmem:[#allocation2 + $0x1b8] sm:$0xff]
          %v1135 = vld [vmem:[#allocation2 + $0x1c0] sm:$0xff]
          %v1136 = vld [vmem:[#allocation2 + $0x1c8] sm:$0xff]
          %v1137 = vld [vmem:[#allocation2 + $0x1d0] sm:$0xff]
          %v1138 = vld [vmem:[#allocation2 + $0x1d8] sm:$0xff]
          %v1139 = vld [vmem:[#allocation2 + $0x1e0] sm:$0xff]
          %v1140 = vld [vmem:[#allocation2 + $0x1e8] sm:$0xff]
          %v1141 = vld [vmem:[#allocation2 + $0x1f0] sm:$0xff]
          %v1142 = vld [vmem:[#allocation2 + $0x1f8] sm:$0xff]
          %v1143 = vpack.c.bf16 %v1081, %v1079
          %v1144 = vpack.c.bf16 %v1082, %v1080
          %v1145 = vpack.c.bf16 %v1085, %v1083
          %v1146 = vpack.c.bf16 %v1086, %v1084
          %v1147 = vpack.c.bf16 %v1089, %v1087
          %v1148 = vpack.c.bf16 %v1090, %v1088
          %v1149 = vpack.c.bf16 %v1093, %v1091
          %v1150 = vpack.c.bf16 %v1094, %v1092
          %v1151 = vpack.c.bf16 %v1097, %v1095
          %v1152 = vpack.c.bf16 %v1098, %v1096
          %v1153 = vpack.c.bf16 %v1101, %v1099
          %v1154 = vpack.c.bf16 %v1102, %v1100
          %v1155 = vpack.c.bf16 %v1105, %v1103
          %v1156 = vpack.c.bf16 %v1106, %v1104
          %v1157 = vpack.c.bf16 %v1109, %v1107
          %v1158 = vpack.c.bf16 %v1110, %v1108
          %v1159 = vpack.c.bf16 %v1113, %v1111
          %v1160 = vpack.c.bf16 %v1114, %v1112
          %v1161 = vpack.c.bf16 %v1117, %v1115
          %v1162 = vpack.c.bf16 %v1118, %v1116
          %v1163 = vpack.c.bf16 %v1121, %v1119
          %v1164 = vpack.c.bf16 %v1122, %v1120
          %v1165 = vpack.c.bf16 %v1125, %v1123
          %v1166 = vpack.c.bf16 %v1126, %v1124
          %v1167 = vpack.c.bf16 %v1129, %v1127
          %v1168 = vpack.c.bf16 %v1130, %v1128
          %v1169 = vpack.c.bf16 %v1133, %v1131
          %v1170 = vpack.c.bf16 %v1134, %v1132
          %v1171 = vpack.c.bf16 %v1137, %v1135
          %v1172 = vpack.c.bf16 %v1138, %v1136
          %v1173 = vpack.c.bf16 %v1141, %v1139
          %v1174 = vpack.c.bf16 %v1142, %v1140
          %v1207 = vunpack.c.l.b16 %v1143
          %v1208 = vunpack.c.l.b16 %v1144
          %v1209 = vunpack.c.h.b16 %v1143
          %v1210 = vunpack.c.h.b16 %v1144
          %v1211 = vunpack.c.l.b16 %v1145
          %v1212 = vunpack.c.l.b16 %v1146
          %v1213 = vunpack.c.h.b16 %v1145
          %v1214 = vunpack.c.h.b16 %v1146
          %v1215 = vunpack.c.l.b16 %v1147
          %v1216 = vunpack.c.l.b16 %v1148
          %v1217 = vunpack.c.h.b16 %v1147
          %v1218 = vunpack.c.h.b16 %v1148
          %v1219 = vunpack.c.l.b16 %v1149
          %v1220 = vunpack.c.l.b16 %v1150
          %v1221 = vunpack.c.h.b16 %v1149
          %v1222 = vunpack.c.h.b16 %v1150
          %v1223 = vunpack.c.l.b16 %v1151
          %v1224 = vunpack.c.l.b16 %v1152
          %v1225 = vunpack.c.h.b16 %v1151
          %v1226 = vunpack.c.h.b16 %v1152
          %v1227 = vunpack.c.l.b16 %v1153
          %v1228 = vunpack.c.l.b16 %v1154
          %v1229 = vunpack.c.h.b16 %v1153
          %v1230 = vunpack.c.h.b16 %v1154
          %v1231 = vunpack.c.l.b16 %v1155
          %v1232 = vunpack.c.l.b16 %v1156
          %v1233 = vunpack.c.h.b16 %v1155
          %v1234 = vunpack.c.h.b16 %v1156
          %v1235 = vunpack.c.l.b16 %v1157
          %v1236 = vunpack.c.l.b16 %v1158
          %v1237 = vunpack.c.h.b16 %v1157
          %v1238 = vunpack.c.h.b16 %v1158
          %v1239 = vunpack.c.l.b16 %v1159
          %v1240 = vunpack.c.l.b16 %v1160
          %v1241 = vunpack.c.h.b16 %v1159
          %v1242 = vunpack.c.h.b16 %v1160
          %v1243 = vunpack.c.l.b16 %v1161
          %v1244 = vunpack.c.l.b16 %v1162
          %v1245 = vunpack.c.h.b16 %v1161
          %v1246 = vunpack.c.h.b16 %v1162
          %v1247 = vunpack.c.l.b16 %v1163
          %v1248 = vunpack.c.l.b16 %v1164
          %v1249 = vunpack.c.h.b16 %v1163
          %v1250 = vunpack.c.h.b16 %v1164
          %v1251 = vunpack.c.l.b16 %v1165
          %v1252 = vunpack.c.l.b16 %v1166
          %v1253 = vunpack.c.h.b16 %v1165
          %v1254 = vunpack.c.h.b16 %v1166
          %v1255 = vunpack.c.l.b16 %v1167
          %v1256 = vunpack.c.l.b16 %v1168
          %v1257 = vunpack.c.h.b16 %v1167
          %v1258 = vunpack.c.h.b16 %v1168
          %v1259 = vunpack.c.l.b16 %v1169
          %v1260 = vunpack.c.l.b16 %v1170
          %v1261 = vunpack.c.h.b16 %v1169
          %v1262 = vunpack.c.h.b16 %v1170
          %v1263 = vunpack.c.l.b16 %v1171
          %v1264 = vunpack.c.l.b16 %v1172
          %v1265 = vunpack.c.h.b16 %v1171
          %v1266 = vunpack.c.h.b16 %v1172
          %v1267 = vunpack.c.l.b16 %v1173
          %v1268 = vunpack.c.l.b16 %v1174
          %v1269 = vunpack.c.h.b16 %v1173
          %v1270 = vunpack.c.h.b16 %v1174
          %v1271 = vpack.c.b16 %v1208, %v1207
          %v1272 = vpack.c.b16 %v1210, %v1209
          %v1273 = vpack.c.b16 %v1212, %v1211
          %v1274 = vpack.c.b16 %v1214, %v1213
          %v1275 = vpack.c.b16 %v1216, %v1215
          %v1276 = vpack.c.b16 %v1218, %v1217
          %v1277 = vpack.c.b16 %v1220, %v1219
          %v1278 = vpack.c.b16 %v1222, %v1221
          %v1279 = vpack.c.b16 %v1224, %v1223
          %v1280 = vpack.c.b16 %v1226, %v1225
          %v1281 = vpack.c.b16 %v1228, %v1227
          %v1282 = vpack.c.b16 %v1230, %v1229
          %v1283 = vpack.c.b16 %v1232, %v1231
          %v1284 = vpack.c.b16 %v1234, %v1233
          %v1285 = vpack.c.b16 %v1236, %v1235
          %v1286 = vpack.c.b16 %v1238, %v1237
          %v1287 = vpack.c.b16 %v1240, %v1239
          %v1288 = vpack.c.b16 %v1242, %v1241
          %v1289 = vpack.c.b16 %v1244, %v1243
          %v1290 = vpack.c.b16 %v1246, %v1245
          %v1291 = vpack.c.b16 %v1248, %v1247
          %v1292 = vpack.c.b16 %v1250, %v1249
          %v1293 = vpack.c.b16 %v1252, %v1251
          %v1294 = vpack.c.b16 %v1254, %v1253
          %v1295 = vpack.c.b16 %v1256, %v1255
          %v1296 = vpack.c.b16 %v1258, %v1257
          %v1297 = vpack.c.b16 %v1260, %v1259
          %v1298 = vpack.c.b16 %v1262, %v1261
          %v1299 = vpack.c.b16 %v1264, %v1263
          %v1300 = vpack.c.b16 %v1266, %v1265
          %v1301 = vpack.c.b16 %v1268, %v1267
          %v1302 = vpack.c.b16 %v1270, %v1269
          %1335 = vst [vmem:[%s232] sm:$0xff] %v1271
          %1336 = vst [vmem:[%s232 + $0x8] sm:$0xff] %v1272
          %1337 = vst [vmem:[%s232 + $0x10] sm:$0xff] %v1273
          %1338 = vst [vmem:[%s232 + $0x18] sm:$0xff] %v1274
          %1339 = vst [vmem:[%s232 + $0x20] sm:$0xff] %v1275
          %1340 = vst [vmem:[%s232 + $0x28] sm:$0xff] %v1276
          %1341 = vst [vmem:[%s232 + $0x30] sm:$0xff] %v1277
          %1342 = vst [vmem:[%s232 + $0x38] sm:$0xff] %v1278
          %1343 = vst [vmem:[%s232 + $0x40] sm:$0xff] %v1279
          %1344 = vst [vmem:[%s232 + $0x48] sm:$0xff] %v1280
          %1345 = vst [vmem:[%s232 + $0x50] sm:$0xff] %v1281
          %1346 = vst [vmem:[%s232 + $0x58] sm:$0xff] %v1282
          %1347 = vst [vmem:[%s232 + $0x60] sm:$0xff] %v1283
          %1348 = vst [vmem:[%s232 + $0x68] sm:$0xff] %v1284
          %1349 = vst [vmem:[%s232 + $0x70] sm:$0xff] %v1285
          %1350 = vst [vmem:[%s232 + $0x78] sm:$0xff] %v1286
          %1351 = vst [vmem:[%s232 + $0x80] sm:$0xff] %v1287
          %1352 = vst [vmem:[%s232 + $0x88] sm:$0xff] %v1288
          %1353 = vst [vmem:[%s232 + $0x90] sm:$0xff] %v1289
          %1354 = vst [vmem:[%s232 + $0x98] sm:$0xff] %v1290
          %1355 = vst [vmem:[%s232 + $0xa0] sm:$0xff] %v1291
          %1356 = vst [vmem:[%s232 + $0xa8] sm:$0xff] %v1292
          %1357 = vst [vmem:[%s232 + $0xb0] sm:$0xff] %v1293
          %1358 = vst [vmem:[%s232 + $0xb8] sm:$0xff] %v1294
          %1359 = vst [vmem:[%s232 + $0xc0] sm:$0xff] %v1295
          %1360 = vst [vmem:[%s232 + $0xc8] sm:$0xff] %v1296
          %1361 = vst [vmem:[%s232 + $0xd0] sm:$0xff] %v1297
          %1362 = vst [vmem:[%s232 + $0xd8] sm:$0xff] %v1298
          %1363 = vst [vmem:[%s232 + $0xe0] sm:$0xff] %v1299
          %1364 = vst [vmem:[%s232 + $0xe8] sm:$0xff] %v1300
          %1365 = vst [vmem:[%s232 + $0xf0] sm:$0xff] %v1301
          %1366 = vst [vmem:[%s232 + $0xf8] sm:$0xff] %v1302
        $region44: #{tpu_custom_call.1} parent=27 // pred_fallthru
          _
        %s1367 = sand.u32 %s107, 1
        %s1368 = scalar_lea.sflag [#allocation5], %s1367
        %s1369 = sand.u32 %s107, 1
        %s1370 = smul.addr %s1369, 256
        %s1371 = scalar_lea.vmem [#allocation8], %s1370
        // Predicated region
        $region45: #{tpu_custom_call.1} parent=27 // pred_check
          %p1372 = pneg %p117
        $region46: #{tpu_custom_call.1} parent=27 // pred_check_branch
          %1374 = sbr.rel (%p1372) target = $region48
        $region47: #{tpu_custom_call.1} parent=27 // pred_region
          %s1375 = smul.u32 32, %s27
          %s1376 = smul.u32 2, %s28
          %s1378 = ssub.s32 4096, 4096
          %1379 = vsyncadd %s1368, %s1378
          %s1380 = smul.addr %s1375, 6
          %s1381 = sadd.s32 %s1376, %s1380
          %s1382 = smul.addr %s1381, 64
          %s1383 = scalar_lea.hbm %s2, %s1382
          %s1384 = sshll.u32 %s1371, 4
          %s1385 = int_to_ptr.vmem [resolvable:$true] %s1384
          %1390 = dma.vmem_to_hbm [thread:$0]  %s1385, 4096, %s1383, %s1368, 128, 384, 8
        $region48: #{tpu_custom_call.1} parent=27 // pred_fallthru
          _
      $region28: #{tpu_custom_call.1} parent=5 // pred_fallthru
        _
      %p1391 = scmp.le.s32.totalorder 2, %s17
      // Predicated region
      $region49: #{tpu_custom_call.1} parent=5 // pred_check
        %p1392 = pneg %p1391
      $region50: #{tpu_custom_call.1} parent=5 // pred_check_branch
        %1394 = sbr.rel (%p1392) target = $region52
      $region51: #{tpu_custom_call.1} parent=5 // pred_region
        %s1395 = ssub.s32 %s17, 2
        // Predicated region
        $region53: #{tpu_custom_call.1} parent=51 // pred_check
          %p1396 = pneg %p123
        $region54: #{tpu_custom_call.1} parent=51 // pred_check_branch
          %1398 = sbr.rel (%p1396) target = $region56
        $region55: #{tpu_custom_call.1} parent=51 // pred_region
          %s1399 = sand.u32 %s108, 1
          %s1400 = scalar_lea.sflag [#allocation5], %s1399
          %s1401 = sand.u32 %s108, 1
          %s1402 = smul.addr %s1401, 256
          %s1403 = scalar_lea.vmem [#allocation8], %s1402
          %1404 = dma.done %s1400, 4096
        $region56: #{tpu_custom_call.1} parent=51 // pred_fallthru
          _
      $region52: #{tpu_custom_call.1} parent=5 // pred_fallthru
        _
    $region6: #{tpu_custom_call.1} parent=1 // loop_footer
      %s21 = sadd.s32 1, %s17
    $region7: #{tpu_custom_call.1} parent=1 // loop_footer_branch
      %16 = sbr.rel target = $region3
    $region8: #{tpu_custom_call.1} parent=1 // loop_exit
      _
    %1405 = vsyncpa [#allocation4], 1
    %s1406 = scalar_lea.sflag [#allocation4], 1
    %1407 = vsyncpa %s1406, 1
    %1408 = vsyncpa [#allocation7], 1
    %s1409 = scalar_lea.sflag [#allocation7], 1
    %1410 = vsyncpa %s1409, 1
    %1411 = vsyncpa [#allocation5], 1
    %s1412 = scalar_lea.sflag [#allocation5], 1
    %1413 = vsyncpa %s1412, 1

</llo_original>
